<compile_context>
chip_gen: v7x
topology: tpu7x:2x2x1
jax: 0.10.0
libtpu: 0.0.40
codegen_flags: <defaults>
</compile_context>

<pallas_src>
import numpy as np
import jax
import jax.numpy as jnp
from jax.experimental import pallas as pl
from jax.experimental.pallas import tpu as pltpu


def _make_conv_kernel(dB):
    """Kernel for one (n, depth-block) step of the 3x3x3 'same' conv."""

    def kernel(x_hbm_ref, w_ref, b_ref, o_ref, xbuf_ref, sem):
        # x_hbm_ref : (N, Dp, C9p, H*W)   im2col'd padded input, HBM  (bf16)
        # w_ref     : (3, Cout, C9p)      per-kd weight slabs, VMEM   (bf16)
        # b_ref     : (Cout, 1)           bias, VMEM                  (f32)
        # o_ref     : (1, Cout, dB*H*W)   output block, VMEM          (out dtype)
        # xbuf_ref  : (dB+2, C9p, H*W)    depth-halo scratch, VMEM    (bf16)
        n = pl.program_id(0)
        d0 = pl.program_id(1) * dB
        HW = o_ref.shape[-1] // dB

        # One contiguous halo DMA per step (dB+2 consecutive padded-depth
        # planes).  Exposed latency is ~hundreds of ns for these sizes; a
        # 2-slot double buffer could hide it if it ever shows up in profiles.
        cp = pltpu.make_async_copy(
            x_hbm_ref.at[n, pl.ds(d0, dB + 2)], xbuf_ref, sem)
        cp.start()
        cp.wait()

        # Hoist resident operands out of the unrolled plane loop.
        w0 = w_ref[0]          # (Cout, C9p)
        w1 = w_ref[1]
        w2 = w_ref[2]
        b = b_ref[...]         # (Cout, 1), broadcasts along lanes

        # One output depth plane per iteration: 3 accumulated MXU matmuls
        # (Cout, C9p) @ (C9p, H*W) -> (Cout, H*W), f32 accumulation.
        for j in range(dB):    # static unroll
            acc = jnp.dot(w0, xbuf_ref[j], preferred_element_type=jnp.float32)
            acc = acc + jnp.dot(w1, xbuf_ref[j + 1],
                                preferred_element_type=jnp.float32)
            acc = acc + jnp.dot(w2, xbuf_ref[j + 2],
                                preferred_element_type=jnp.float32)
            # Lane-dense store: static, 128-aligned lane offset, full sublanes.
            o_ref[0, :, pl.ds(j * HW, HW)] = (acc + b).astype(o_ref.dtype)

    return kernel


@jax.jit
def conv3d_3x3x3_pallas(x, weight, bias):
    """3x3x3 'same' Conv3d.  x: (N,Cin,D,H,W); weight: (Cout,Cin,3,3,3); bias: (Cout,).

    Returns (N, Cout, D, H, W) in x.dtype (NCDHW, PyTorch convention).
    """
    N, Cin, D, H, W = x.shape
    Cout = weight.shape[0]
    HW = H * W
    Dp = D + 2
    C9 = 9 * Cin
    C9p = ((C9 + 15) // 16) * 16          # bf16 sublane multiple -> clean MXU feed

    # Depth block: out block's second-to-minor dim must be %8 or the full dim.
    dB = 8 if (D % 8 == 0 and D >= 8) else D

    # ---------------- wrapper prep (tiny input; XLA fuses these) -------------
    # Cast first so cast+pad fuse into one pass; fold the (kh,kw) shifts into
    # the channel dim so the kernel never concatenates 4-lane taps.
    xb = x.astype(jnp.bfloat16)
    x_pad = jnp.pad(xb, ((0, 0), (0, 0), (1, 1), (1, 1), (1, 1)))   # (N,Cin,Dp,Hp,Wp)
    x_pad = jnp.transpose(x_pad, (0, 2, 1, 3, 4))                   # (N,Dp,Cin,Hp,Wp)
    pieces = [x_pad[:, :, :, kh:kh + H, kw:kw + W]                  # (N,Dp,Cin,H,W)
              for kh in range(3) for kw in range(3)]
    xw = jnp.stack(pieces, axis=2)                                  # (N,Dp,9,Cin,H,W)
    xw = xw.reshape(N, Dp, C9, HW)                                  # free (layout-compat)
    if C9p != C9:
        xw = jnp.pad(xw, ((0, 0), (0, 0), (0, C9p - C9), (0, 0)))   # zero channels

    # weight (Cout,Cin,kd,kh,kw) -> (kd, Cout, (kh*3+kw)*Cin+ci), zero-padded K.
    w3 = jnp.transpose(weight, (2, 0, 3, 4, 1)).reshape(3, Cout, C9)
    if C9p != C9:
        w3 = jnp.pad(w3, ((0, 0), (0, 0), (0, C9p - C9)))
    w3 = w3.astype(jnp.bfloat16)
    b2 = bias.astype(jnp.float32).reshape(Cout, 1)

    flops = 2 * N * D * HW * Cout * 27 * Cin
    bytes_accessed = int(xw.size * 2 + w3.size * 2 + b2.size * 4
                         + N * Cout * D * HW * x.dtype.itemsize)

    out = pl.pallas_call(
        _make_conv_kernel(dB),
        out_shape=jax.ShapeDtypeStruct((N, Cout, D * HW), x.dtype),
        grid_spec=pltpu.PrefetchScalarGridSpec(
            num_scalar_prefetch=0,
            grid=(N, D // dB),
            in_specs=[
                # im2col'd input stays in HBM; halo window DMA'd manually.
                pl.BlockSpec(memory_space=pl.ANY),
                # weights & bias: constant index map -> fetched once, resident.
                pl.BlockSpec((3, Cout, C9p), lambda n, d: (0, 0, 0)),
                pl.BlockSpec((Cout, 1), lambda n, d: (0, 0)),
            ],
            out_specs=pl.BlockSpec((1, Cout, dB * HW), lambda n, d: (n, 0, d)),
            scratch_shapes=[
                pltpu.VMEM((dB + 2, C9p, HW), jnp.bfloat16),   # depth-halo buffer
                pltpu.SemaphoreType.DMA,
            ],
        ),
        compiler_params=pltpu.CompilerParams(
            dimension_semantics=("parallel", "parallel")),
        cost_estimate=pl.CostEstimate(flops=flops, transcendentals=0,
                                      bytes_accessed=bytes_accessed),
    )(xw, w3, b2)

    # Splitting the minor dim (D*H*W) -> (D, H, W) is layout-compatible (free).
    return out.reshape(N, Cout, D, H, W)


class InConvPallas:
    """JAX/Pallas equivalent of the PyTorch `inConv` module (Conv3d k=3, pad=1)."""

    def __init__(self, in_ch, out_ch, key):
        # xavier_uniform_(weight, gain=sqrt(2)); constant_(bias, 0)
        fan_in = in_ch * 27
        fan_out = out_ch * 27
        gain = float(np.sqrt(2.0))
        bound = gain * float(np.sqrt(6.0 / (fan_in + fan_out)))
        self.weight = jax.random.uniform(
            key, (out_ch, in_ch, 3, 3, 3), jnp.float32, minval=-bound, maxval=bound)
        self.bias = jnp.zeros((out_ch,), jnp.float32)

    def __call__(self, x_ncdhw):
        # NCDHW in / NCDHW out, no wrapper-side layout passes on the output.
        return conv3d_3x3x3_pallas(x_ncdhw, self.weight, self.bias)


if __name__ == "__main__":
    key = jax.random.PRNGKey(0)
    k_x, k_w = jax.random.split(key)

    N, Cin, Cout, D, H, W = 2, 4, 8, 16, 16, 16
    x = jax.random.normal(k_x, (N, Cin, D, H, W), jnp.float32)

    module = InConvPallas(Cin, Cout, k_w)
    y = jax.block_until_ready(module(x))
    assert y.shape == (N, Cout, D, H, W), y.shape

    # Reference: XLA conv in f32 HIGHEST; kernel uses bf16 MXU operands with
    # f32 accumulation, hence the ~1e-2 tolerance.
    y_ref = jax.lax.conv_general_dilated(
        x, module.weight,
        window_strides=(1, 1, 1),
        padding=((1, 1), (1, 1), (1, 1)),
        dimension_numbers=("NCDHW", "OIDHW", "NCDHW"),
        precision=jax.lax.Precision.HIGHEST,
    ) + module.bias.reshape(1, Cout, 1, 1, 1)
    np.testing.assert_allclose(np.asarray(y), np.asarray(y_ref), rtol=2e-2, atol=2e-2)

    print("KERNEL_OK")
</pallas_src>

<mosaic_0001>
module attributes {stable_mosaic.version = 11 : i64} {
  func.func @kernel(%arg0: i32, %arg1: i32, %arg2: memref<2x18x48x256xbf16, #tpu.memory_space<any>>, %arg3: memref<3x8x48xbf16, #tpu.memory_space<vmem>>, %arg4: memref<8x1xf32, #tpu.memory_space<vmem>>, %arg5: memref<1x8x2048xf32, #tpu.memory_space<vmem>>, %arg6: memref<10x48x256xbf16, #tpu.memory_space<vmem>>, %arg7: memref<!tpu.dma_semaphore, #tpu.memory_space<semaphore_mem>>) attributes {dimension_semantics = [#tpu.dimension_semantics<parallel>, #tpu.dimension_semantics<parallel>], iteration_bounds = array<i64: 2, 2>, scalar_prefetch = 0 : i64, scratch_operands = 2 : i64, tpu.core_type = #tpu.core_type<tc>, window_params = [{}, {pipeline_mode = #tpu.pipeline_mode<synchronous>, transform_indices = @transform_1, window_bounds = array<i64: 3, 8, 48>}, {pipeline_mode = #tpu.pipeline_mode<synchronous>, transform_indices = @transform_2, window_bounds = array<i64: 8, 1>}, {transform_indices = @transform_3, window_bounds = array<i64: 1, 8, 2048>}]} {
    %c8_i32 = arith.constant 8 : i32
    %0 = arith.muli %arg1, %c8_i32 : i32
    %c0_i32 = arith.constant 0 : i32
    %c0_i32_0 = arith.constant 0 : i32
    %1 = tpu.memref_slice %arg2[%arg0, %0, %c0_i32, %c0_i32_0] : memref<2x18x48x256xbf16, #tpu.memory_space<any>> -> memref<1x10x48x256xbf16, #tpu.memory_space<any>>
    %2 = tpu.memref_squeeze %1 : memref<1x10x48x256xbf16, #tpu.memory_space<any>> -> memref<10x48x256xbf16, #tpu.memory_space<any>>
    tpu.enqueue_dma source(%2 : memref<10x48x256xbf16, #tpu.memory_space<any>>) target(%arg6 : memref<10x48x256xbf16, #tpu.memory_space<vmem>>) target_semaphore(%arg7 : memref<!tpu.dma_semaphore, #tpu.memory_space<semaphore_mem>>)
    %c0_i32_1 = arith.constant 0 : i32
    %c0_i32_2 = arith.constant 0 : i32
    %3 = tpu.memref_slice %arg2[%arg0, %0, %c0_i32_1, %c0_i32_2] : memref<2x18x48x256xbf16, #tpu.memory_space<any>> -> memref<1x10x48x256xbf16, #tpu.memory_space<any>>
    %4 = tpu.memref_squeeze %3 : memref<1x10x48x256xbf16, #tpu.memory_space<any>> -> memref<10x48x256xbf16, #tpu.memory_space<any>>
    tpu.wait_dma2 semaphore(%arg7 : memref<!tpu.dma_semaphore, #tpu.memory_space<semaphore_mem>>) src(%4 : memref<10x48x256xbf16, #tpu.memory_space<any>>) dst(%arg6 : memref<10x48x256xbf16, #tpu.memory_space<vmem>>)
    %c0 = arith.constant 0 : index
    %c0_3 = arith.constant 0 : index
    %c0_4 = arith.constant 0 : index
    %5 = vector.load %arg3[%c0, %c0_3, %c0_4] : memref<3x8x48xbf16, #tpu.memory_space<vmem>>, vector<1x8x48xbf16>
    %6 = vector.shape_cast %5 : vector<1x8x48xbf16> to vector<8x48xbf16>
    %c1 = arith.constant 1 : index
    %c0_5 = arith.constant 0 : index
    %c0_6 = arith.constant 0 : index
    %7 = vector.load %arg3[%c1, %c0_5, %c0_6] : memref<3x8x48xbf16, #tpu.memory_space<vmem>>, vector<1x8x48xbf16>
    %8 = vector.shape_cast %7 : vector<1x8x48xbf16> to vector<8x48xbf16>
    %c2 = arith.constant 2 : index
    %c0_7 = arith.constant 0 : index
    %c0_8 = arith.constant 0 : index
    %9 = vector.load %arg3[%c2, %c0_7, %c0_8] : memref<3x8x48xbf16, #tpu.memory_space<vmem>>, vector<1x8x48xbf16>
    %10 = vector.shape_cast %9 : vector<1x8x48xbf16> to vector<8x48xbf16>
    %c0_9 = arith.constant 0 : index
    %c0_10 = arith.constant 0 : index
    %11 = vector.load %arg4[%c0_9, %c0_10] : memref<8x1xf32, #tpu.memory_space<vmem>>, vector<8x1xf32>
    %c0_11 = arith.constant 0 : index
    %c0_12 = arith.constant 0 : index
    %c0_13 = arith.constant 0 : index
    %12 = vector.load %arg6[%c0_11, %c0_12, %c0_13] : memref<10x48x256xbf16, #tpu.memory_space<vmem>>, vector<1x48x256xbf16>
    %13 = vector.shape_cast %12 : vector<1x48x256xbf16> to vector<48x256xbf16>
    %cst = arith.constant dense<0.000000e+00> : vector<8x256xf32>
    %14 = tpu.matmul %6, %13, %cst {dimension_numbers = #tpu.dot_dimension_numbers<[1], [0], [0], [1], [0, 0, 1, 1], [], []>} : vector<8x48xbf16>, vector<48x256xbf16>, vector<8x256xf32> -> vector<8x256xf32>
    %c1_14 = arith.constant 1 : index
    %c0_15 = arith.constant 0 : index
    %c0_16 = arith.constant 0 : index
    %15 = vector.load %arg6[%c1_14, %c0_15, %c0_16] : memref<10x48x256xbf16, #tpu.memory_space<vmem>>, vector<1x48x256xbf16>
    %16 = vector.shape_cast %15 : vector<1x48x256xbf16> to vector<48x256xbf16>
    %cst_17 = arith.constant dense<0.000000e+00> : vector<8x256xf32>
    %17 = tpu.matmul %8, %16, %cst_17 {dimension_numbers = #tpu.dot_dimension_numbers<[1], [0], [0], [1], [0, 0, 1, 1], [], []>} : vector<8x48xbf16>, vector<48x256xbf16>, vector<8x256xf32> -> vector<8x256xf32>
    %18 = arith.addf %14, %17 : vector<8x256xf32>
    %c2_18 = arith.constant 2 : index
    %c0_19 = arith.constant 0 : index
    %c0_20 = arith.constant 0 : index
    %19 = vector.load %arg6[%c2_18, %c0_19, %c0_20] : memref<10x48x256xbf16, #tpu.memory_space<vmem>>, vector<1x48x256xbf16>
    %20 = vector.shape_cast %19 : vector<1x48x256xbf16> to vector<48x256xbf16>
    %cst_21 = arith.constant dense<0.000000e+00> : vector<8x256xf32>
    %21 = tpu.matmul %10, %20, %cst_21 {dimension_numbers = #tpu.dot_dimension_numbers<[1], [0], [0], [1], [0, 0, 1, 1], [], []>} : vector<8x48xbf16>, vector<48x256xbf16>, vector<8x256xf32> -> vector<8x256xf32>
    %22 = arith.addf %18, %21 : vector<8x256xf32>
    %23 = vector.broadcast %11 : vector<8x1xf32> to vector<8x256xf32>
    %24 = arith.addf %22, %23 : vector<8x256xf32>
    %c0_22 = arith.constant 0 : index
    %c0_23 = arith.constant 0 : index
    %c0_24 = arith.constant 0 : index
    %25 = vector.load %arg5[%c0_22, %c0_23, %c0_24] : memref<1x8x2048xf32, #tpu.memory_space<vmem>>, vector<1x8x256xf32>
    %26 = vector.shape_cast %25 : vector<1x8x256xf32> to vector<8x256xf32>
    %27 = vector.shape_cast %24 : vector<8x256xf32> to vector<1x8x256xf32>
    tpu.vector_store %arg5[%c0_22, %c0_23, %c0_24], %27 {strides = array<i32>} : memref<1x8x2048xf32, #tpu.memory_space<vmem>>, vector<1x8x256xf32>,
    %c1_25 = arith.constant 1 : index
    %c0_26 = arith.constant 0 : index
    %c0_27 = arith.constant 0 : index
    %28 = vector.load %arg6[%c1_25, %c0_26, %c0_27] : memref<10x48x256xbf16, #tpu.memory_space<vmem>>, vector<1x48x256xbf16>
    %29 = vector.shape_cast %28 : vector<1x48x256xbf16> to vector<48x256xbf16>
    %cst_28 = arith.constant dense<0.000000e+00> : vector<8x256xf32>
    %30 = tpu.matmul %6, %29, %cst_28 {dimension_numbers = #tpu.dot_dimension_numbers<[1], [0], [0], [1], [0, 0, 1, 1], [], []>} : vector<8x48xbf16>, vector<48x256xbf16>, vector<8x256xf32> -> vector<8x256xf32>
    %c2_29 = arith.constant 2 : index
    %c0_30 = arith.constant 0 : index
    %c0_31 = arith.constant 0 : index
    %31 = vector.load %arg6[%c2_29, %c0_30, %c0_31] : memref<10x48x256xbf16, #tpu.memory_space<vmem>>, vector<1x48x256xbf16>
    %32 = vector.shape_cast %31 : vector<1x48x256xbf16> to vector<48x256xbf16>
    %cst_32 = arith.constant dense<0.000000e+00> : vector<8x256xf32>
    %33 = tpu.matmul %8, %32, %cst_32 {dimension_numbers = #tpu.dot_dimension_numbers<[1], [0], [0], [1], [0, 0, 1, 1], [], []>} : vector<8x48xbf16>, vector<48x256xbf16>, vector<8x256xf32> -> vector<8x256xf32>
    %34 = arith.addf %30, %33 : vector<8x256xf32>
    %c3 = arith.constant 3 : index
    %c0_33 = arith.constant 0 : index
    %c0_34 = arith.constant 0 : index
    %35 = vector.load %arg6[%c3, %c0_33, %c0_34] : memref<10x48x256xbf16, #tpu.memory_space<vmem>>, vector<1x48x256xbf16>
    %36 = vector.shape_cast %35 : vector<1x48x256xbf16> to vector<48x256xbf16>
    %cst_35 = arith.constant dense<0.000000e+00> : vector<8x256xf32>
    %37 = tpu.matmul %10, %36, %cst_35 {dimension_numbers = #tpu.dot_dimension_numbers<[1], [0], [0], [1], [0, 0, 1, 1], [], []>} : vector<8x48xbf16>, vector<48x256xbf16>, vector<8x256xf32> -> vector<8x256xf32>
    %38 = arith.addf %34, %37 : vector<8x256xf32>
    %39 = vector.broadcast %11 : vector<8x1xf32> to vector<8x256xf32>
    %40 = arith.addf %38, %39 : vector<8x256xf32>
    %c0_36 = arith.constant 0 : index
    %c0_37 = arith.constant 0 : index
    %c256 = arith.constant 256 : index
    %41 = vector.load %arg5[%c0_36, %c0_37, %c256] : memref<1x8x2048xf32, #tpu.memory_space<vmem>>, vector<1x8x256xf32>
    %42 = vector.shape_cast %41 : vector<1x8x256xf32> to vector<8x256xf32>
    %43 = vector.shape_cast %40 : vector<8x256xf32> to vector<1x8x256xf32>
    tpu.vector_store %arg5[%c0_36, %c0_37, %c256], %43 {strides = array<i32>} : memref<1x8x2048xf32, #tpu.memory_space<vmem>>, vector<1x8x256xf32>,
    %c2_38 = arith.constant 2 : index
    %c0_39 = arith.constant 0 : index
    %c0_40 = arith.constant 0 : index
    %44 = vector.load %arg6[%c2_38, %c0_39, %c0_40] : memref<10x48x256xbf16, #tpu.memory_space<vmem>>, vector<1x48x256xbf16>
    %45 = vector.shape_cast %44 : vector<1x48x256xbf16> to vector<48x256xbf16>
    %cst_41 = arith.constant dense<0.000000e+00> : vector<8x256xf32>
    %46 = tpu.matmul %6, %45, %cst_41 {dimension_numbers = #tpu.dot_dimension_numbers<[1], [0], [0], [1], [0, 0, 1, 1], [], []>} : vector<8x48xbf16>, vector<48x256xbf16>, vector<8x256xf32> -> vector<8x256xf32>
    %c3_42 = arith.constant 3 : index
    %c0_43 = arith.constant 0 : index
    %c0_44 = arith.constant 0 : index
    %47 = vector.load %arg6[%c3_42, %c0_43, %c0_44] : memref<10x48x256xbf16, #tpu.memory_space<vmem>>, vector<1x48x256xbf16>
    %48 = vector.shape_cast %47 : vector<1x48x256xbf16> to vector<48x256xbf16>
    %cst_45 = arith.constant dense<0.000000e+00> : vector<8x256xf32>
    %49 = tpu.matmul %8, %48, %cst_45 {dimension_numbers = #tpu.dot_dimension_numbers<[1], [0], [0], [1], [0, 0, 1, 1], [], []>} : vector<8x48xbf16>, vector<48x256xbf16>, vector<8x256xf32> -> vector<8x256xf32>
    %50 = arith.addf %46, %49 : vector<8x256xf32>
    %c4 = arith.constant 4 : index
    %c0_46 = arith.constant 0 : index
    %c0_47 = arith.constant 0 : index
    %51 = vector.load %arg6[%c4, %c0_46, %c0_47] : memref<10x48x256xbf16, #tpu.memory_space<vmem>>, vector<1x48x256xbf16>
    %52 = vector.shape_cast %51 : vector<1x48x256xbf16> to vector<48x256xbf16>
    %cst_48 = arith.constant dense<0.000000e+00> : vector<8x256xf32>
    %53 = tpu.matmul %10, %52, %cst_48 {dimension_numbers = #tpu.dot_dimension_numbers<[1], [0], [0], [1], [0, 0, 1, 1], [], []>} : vector<8x48xbf16>, vector<48x256xbf16>, vector<8x256xf32> -> vector<8x256xf32>
    %54 = arith.addf %50, %53 : vector<8x256xf32>
    %55 = vector.broadcast %11 : vector<8x1xf32> to vector<8x256xf32>
    %56 = arith.addf %54, %55 : vector<8x256xf32>
    %c0_49 = arith.constant 0 : index
    %c0_50 = arith.constant 0 : index
    %c512 = arith.constant 512 : index
    %57 = vector.load %arg5[%c0_49, %c0_50, %c512] : memref<1x8x2048xf32, #tpu.memory_space<vmem>>, vector<1x8x256xf32>
    %58 = vector.shape_cast %57 : vector<1x8x256xf32> to vector<8x256xf32>
    %59 = vector.shape_cast %56 : vector<8x256xf32> to vector<1x8x256xf32>
    tpu.vector_store %arg5[%c0_49, %c0_50, %c512], %59 {strides = array<i32>} : memref<1x8x2048xf32, #tpu.memory_space<vmem>>, vector<1x8x256xf32>,
    %c3_51 = arith.constant 3 : index
    %c0_52 = arith.constant 0 : index
    %c0_53 = arith.constant 0 : index
    %60 = vector.load %arg6[%c3_51, %c0_52, %c0_53] : memref<10x48x256xbf16, #tpu.memory_space<vmem>>, vector<1x48x256xbf16>
    %61 = vector.shape_cast %60 : vector<1x48x256xbf16> to vector<48x256xbf16>
    %cst_54 = arith.constant dense<0.000000e+00> : vector<8x256xf32>
    %62 = tpu.matmul %6, %61, %cst_54 {dimension_numbers = #tpu.dot_dimension_numbers<[1], [0], [0], [1], [0, 0, 1, 1], [], []>} : vector<8x48xbf16>, vector<48x256xbf16>, vector<8x256xf32> -> vector<8x256xf32>
    %c4_55 = arith.constant 4 : index
    %c0_56 = arith.constant 0 : index
    %c0_57 = arith.constant 0 : index
    %63 = vector.load %arg6[%c4_55, %c0_56, %c0_57] : memref<10x48x256xbf16, #tpu.memory_space<vmem>>, vector<1x48x256xbf16>
    %64 = vector.shape_cast %63 : vector<1x48x256xbf16> to vector<48x256xbf16>
    %cst_58 = arith.constant dense<0.000000e+00> : vector<8x256xf32>
    %65 = tpu.matmul %8, %64, %cst_58 {dimension_numbers = #tpu.dot_dimension_numbers<[1], [0], [0], [1], [0, 0, 1, 1], [], []>} : vector<8x48xbf16>, vector<48x256xbf16>, vector<8x256xf32> -> vector<8x256xf32>
    %66 = arith.addf %62, %65 : vector<8x256xf32>
    %c5 = arith.constant 5 : index
    %c0_59 = arith.constant 0 : index
    %c0_60 = arith.constant 0 : index
    %67 = vector.load %arg6[%c5, %c0_59, %c0_60] : memref<10x48x256xbf16, #tpu.memory_space<vmem>>, vector<1x48x256xbf16>
    %68 = vector.shape_cast %67 : vector<1x48x256xbf16> to vector<48x256xbf16>
    %cst_61 = arith.constant dense<0.000000e+00> : vector<8x256xf32>
    %69 = tpu.matmul %10, %68, %cst_61 {dimension_numbers = #tpu.dot_dimension_numbers<[1], [0], [0], [1], [0, 0, 1, 1], [], []>} : vector<8x48xbf16>, vector<48x256xbf16>, vector<8x256xf32> -> vector<8x256xf32>
    %70 = arith.addf %66, %69 : vector<8x256xf32>
    %71 = vector.broadcast %11 : vector<8x1xf32> to vector<8x256xf32>
    %72 = arith.addf %70, %71 : vector<8x256xf32>
    %c0_62 = arith.constant 0 : index
    %c0_63 = arith.constant 0 : index
    %c768 = arith.constant 768 : index
    %73 = vector.load %arg5[%c0_62, %c0_63, %c768] : memref<1x8x2048xf32, #tpu.memory_space<vmem>>, vector<1x8x256xf32>
    %74 = vector.shape_cast %73 : vector<1x8x256xf32> to vector<8x256xf32>
    %75 = vector.shape_cast %72 : vector<8x256xf32> to vector<1x8x256xf32>
    tpu.vector_store %arg5[%c0_62, %c0_63, %c768], %75 {strides = array<i32>} : memref<1x8x2048xf32, #tpu.memory_space<vmem>>, vector<1x8x256xf32>,
    %c4_64 = arith.constant 4 : index
    %c0_65 = arith.constant 0 : index
    %c0_66 = arith.constant 0 : index
    %76 = vector.load %arg6[%c4_64, %c0_65, %c0_66] : memref<10x48x256xbf16, #tpu.memory_space<vmem>>, vector<1x48x256xbf16>
    %77 = vector.shape_cast %76 : vector<1x48x256xbf16> to vector<48x256xbf16>
    %cst_67 = arith.constant dense<0.000000e+00> : vector<8x256xf32>
    %78 = tpu.matmul %6, %77, %cst_67 {dimension_numbers = #tpu.dot_dimension_numbers<[1], [0], [0], [1], [0, 0, 1, 1], [], []>} : vector<8x48xbf16>, vector<48x256xbf16>, vector<8x256xf32> -> vector<8x256xf32>
    %c5_68 = arith.constant 5 : index
    %c0_69 = arith.constant 0 : index
    %c0_70 = arith.constant 0 : index
    %79 = vector.load %arg6[%c5_68, %c0_69, %c0_70] : memref<10x48x256xbf16, #tpu.memory_space<vmem>>, vector<1x48x256xbf16>
    %80 = vector.shape_cast %79 : vector<1x48x256xbf16> to vector<48x256xbf16>
    %cst_71 = arith.constant dense<0.000000e+00> : vector<8x256xf32>
    %81 = tpu.matmul %8, %80, %cst_71 {dimension_numbers = #tpu.dot_dimension_numbers<[1], [0], [0], [1], [0, 0, 1, 1], [], []>} : vector<8x48xbf16>, vector<48x256xbf16>, vector<8x256xf32> -> vector<8x256xf32>
    %82 = arith.addf %78, %81 : vector<8x256xf32>
    %c6 = arith.constant 6 : index
    %c0_72 = arith.constant 0 : index
    %c0_73 = arith.constant 0 : index
    %83 = vector.load %arg6[%c6, %c0_72, %c0_73] : memref<10x48x256xbf16, #tpu.memory_space<vmem>>, vector<1x48x256xbf16>
    %84 = vector.shape_cast %83 : vector<1x48x256xbf16> to vector<48x256xbf16>
    %cst_74 = arith.constant dense<0.000000e+00> : vector<8x256xf32>
    %85 = tpu.matmul %10, %84, %cst_74 {dimension_numbers = #tpu.dot_dimension_numbers<[1], [0], [0], [1], [0, 0, 1, 1], [], []>} : vector<8x48xbf16>, vector<48x256xbf16>, vector<8x256xf32> -> vector<8x256xf32>
    %86 = arith.addf %82, %85 : vector<8x256xf32>
    %87 = vector.broadcast %11 : vector<8x1xf32> to vector<8x256xf32>
    %88 = arith.addf %86, %87 : vector<8x256xf32>
    %c0_75 = arith.constant 0 : index
    %c0_76 = arith.constant 0 : index
    %c1024 = arith.constant 1024 : index
    %89 = vector.load %arg5[%c0_75, %c0_76, %c1024] : memref<1x8x2048xf32, #tpu.memory_space<vmem>>, vector<1x8x256xf32>
    %90 = vector.shape_cast %89 : vector<1x8x256xf32> to vector<8x256xf32>
    %91 = vector.shape_cast %88 : vector<8x256xf32> to vector<1x8x256xf32>
    tpu.vector_store %arg5[%c0_75, %c0_76, %c1024], %91 {strides = array<i32>} : memref<1x8x2048xf32, #tpu.memory_space<vmem>>, vector<1x8x256xf32>,
    %c5_77 = arith.constant 5 : index
    %c0_78 = arith.constant 0 : index
    %c0_79 = arith.constant 0 : index
    %92 = vector.load %arg6[%c5_77, %c0_78, %c0_79] : memref<10x48x256xbf16, #tpu.memory_space<vmem>>, vector<1x48x256xbf16>
    %93 = vector.shape_cast %92 : vector<1x48x256xbf16> to vector<48x256xbf16>
    %cst_80 = arith.constant dense<0.000000e+00> : vector<8x256xf32>
    %94 = tpu.matmul %6, %93, %cst_80 {dimension_numbers = #tpu.dot_dimension_numbers<[1], [0], [0], [1], [0, 0, 1, 1], [], []>} : vector<8x48xbf16>, vector<48x256xbf16>, vector<8x256xf32> -> vector<8x256xf32>
    %c6_81 = arith.constant 6 : index
    %c0_82 = arith.constant 0 : index
    %c0_83 = arith.constant 0 : index
    %95 = vector.load %arg6[%c6_81, %c0_82, %c0_83] : memref<10x48x256xbf16, #tpu.memory_space<vmem>>, vector<1x48x256xbf16>
    %96 = vector.shape_cast %95 : vector<1x48x256xbf16> to vector<48x256xbf16>
    %cst_84 = arith.constant dense<0.000000e+00> : vector<8x256xf32>
    %97 = tpu.matmul %8, %96, %cst_84 {dimension_numbers = #tpu.dot_dimension_numbers<[1], [0], [0], [1], [0, 0, 1, 1], [], []>} : vector<8x48xbf16>, vector<48x256xbf16>, vector<8x256xf32> -> vector<8x256xf32>
    %98 = arith.addf %94, %97 : vector<8x256xf32>
    %c7 = arith.constant 7 : index
    %c0_85 = arith.constant 0 : index
    %c0_86 = arith.constant 0 : index
    %99 = vector.load %arg6[%c7, %c0_85, %c0_86] : memref<10x48x256xbf16, #tpu.memory_space<vmem>>, vector<1x48x256xbf16>
    %100 = vector.shape_cast %99 : vector<1x48x256xbf16> to vector<48x256xbf16>
    %cst_87 = arith.constant dense<0.000000e+00> : vector<8x256xf32>
    %101 = tpu.matmul %10, %100, %cst_87 {dimension_numbers = #tpu.dot_dimension_numbers<[1], [0], [0], [1], [0, 0, 1, 1], [], []>} : vector<8x48xbf16>, vector<48x256xbf16>, vector<8x256xf32> -> vector<8x256xf32>
    %102 = arith.addf %98, %101 : vector<8x256xf32>
    %103 = vector.broadcast %11 : vector<8x1xf32> to vector<8x256xf32>
    %104 = arith.addf %102, %103 : vector<8x256xf32>
    %c0_88 = arith.constant 0 : index
    %c0_89 = arith.constant 0 : index
    %c1280 = arith.constant 1280 : index
    %105 = vector.load %arg5[%c0_88, %c0_89, %c1280] : memref<1x8x2048xf32, #tpu.memory_space<vmem>>, vector<1x8x256xf32>
    %106 = vector.shape_cast %105 : vector<1x8x256xf32> to vector<8x256xf32>
    %107 = vector.shape_cast %104 : vector<8x256xf32> to vector<1x8x256xf32>
    tpu.vector_store %arg5[%c0_88, %c0_89, %c1280], %107 {strides = array<i32>} : memref<1x8x2048xf32, #tpu.memory_space<vmem>>, vector<1x8x256xf32>,
    %c6_90 = arith.constant 6 : index
    %c0_91 = arith.constant 0 : index
    %c0_92 = arith.constant 0 : index
    %108 = vector.load %arg6[%c6_90, %c0_91, %c0_92] : memref<10x48x256xbf16, #tpu.memory_space<vmem>>, vector<1x48x256xbf16>
    %109 = vector.shape_cast %108 : vector<1x48x256xbf16> to vector<48x256xbf16>
    %cst_93 = arith.constant dense<0.000000e+00> : vector<8x256xf32>
    %110 = tpu.matmul %6, %109, %cst_93 {dimension_numbers = #tpu.dot_dimension_numbers<[1], [0], [0], [1], [0, 0, 1, 1], [], []>} : vector<8x48xbf16>, vector<48x256xbf16>, vector<8x256xf32> -> vector<8x256xf32>
    %c7_94 = arith.constant 7 : index
    %c0_95 = arith.constant 0 : index
    %c0_96 = arith.constant 0 : index
    %111 = vector.load %arg6[%c7_94, %c0_95, %c0_96] : memref<10x48x256xbf16, #tpu.memory_space<vmem>>, vector<1x48x256xbf16>
    %112 = vector.shape_cast %111 : vector<1x48x256xbf16> to vector<48x256xbf16>
    %cst_97 = arith.constant dense<0.000000e+00> : vector<8x256xf32>
    %113 = tpu.matmul %8, %112, %cst_97 {dimension_numbers = #tpu.dot_dimension_numbers<[1], [0], [0], [1], [0, 0, 1, 1], [], []>} : vector<8x48xbf16>, vector<48x256xbf16>, vector<8x256xf32> -> vector<8x256xf32>
    %114 = arith.addf %110, %113 : vector<8x256xf32>
    %c8 = arith.constant 8 : index
    %c0_98 = arith.constant 0 : index
    %c0_99 = arith.constant 0 : index
    %115 = vector.load %arg6[%c8, %c0_98, %c0_99] : memref<10x48x256xbf16, #tpu.memory_space<vmem>>, vector<1x48x256xbf16>
    %116 = vector.shape_cast %115 : vector<1x48x256xbf16> to vector<48x256xbf16>
    %cst_100 = arith.constant dense<0.000000e+00> : vector<8x256xf32>
    %117 = tpu.matmul %10, %116, %cst_100 {dimension_numbers = #tpu.dot_dimension_numbers<[1], [0], [0], [1], [0, 0, 1, 1], [], []>} : vector<8x48xbf16>, vector<48x256xbf16>, vector<8x256xf32> -> vector<8x256xf32>
    %118 = arith.addf %114, %117 : vector<8x256xf32>
    %119 = vector.broadcast %11 : vector<8x1xf32> to vector<8x256xf32>
    %120 = arith.addf %118, %119 : vector<8x256xf32>
    %c0_101 = arith.constant 0 : index
    %c0_102 = arith.constant 0 : index
    %c1536 = arith.constant 1536 : index
    %121 = vector.load %arg5[%c0_101, %c0_102, %c1536] : memref<1x8x2048xf32, #tpu.memory_space<vmem>>, vector<1x8x256xf32>
    %122 = vector.shape_cast %121 : vector<1x8x256xf32> to vector<8x256xf32>
    %123 = vector.shape_cast %120 : vector<8x256xf32> to vector<1x8x256xf32>
    tpu.vector_store %arg5[%c0_101, %c0_102, %c1536], %123 {strides = array<i32>} : memref<1x8x2048xf32, #tpu.memory_space<vmem>>, vector<1x8x256xf32>,
    %c7_103 = arith.constant 7 : index
    %c0_104 = arith.constant 0 : index
    %c0_105 = arith.constant 0 : index
    %124 = vector.load %arg6[%c7_103, %c0_104, %c0_105] : memref<10x48x256xbf16, #tpu.memory_space<vmem>>, vector<1x48x256xbf16>
    %125 = vector.shape_cast %124 : vector<1x48x256xbf16> to vector<48x256xbf16>
    %cst_106 = arith.constant dense<0.000000e+00> : vector<8x256xf32>
    %126 = tpu.matmul %6, %125, %cst_106 {dimension_numbers = #tpu.dot_dimension_numbers<[1], [0], [0], [1], [0, 0, 1, 1], [], []>} : vector<8x48xbf16>, vector<48x256xbf16>, vector<8x256xf32> -> vector<8x256xf32>
    %c8_107 = arith.constant 8 : index
    %c0_108 = arith.constant 0 : index
    %c0_109 = arith.constant 0 : index
    %127 = vector.load %arg6[%c8_107, %c0_108, %c0_109] : memref<10x48x256xbf16, #tpu.memory_space<vmem>>, vector<1x48x256xbf16>
    %128 = vector.shape_cast %127 : vector<1x48x256xbf16> to vector<48x256xbf16>
    %cst_110 = arith.constant dense<0.000000e+00> : vector<8x256xf32>
    %129 = tpu.matmul %8, %128, %cst_110 {dimension_numbers = #tpu.dot_dimension_numbers<[1], [0], [0], [1], [0, 0, 1, 1], [], []>} : vector<8x48xbf16>, vector<48x256xbf16>, vector<8x256xf32> -> vector<8x256xf32>
    %130 = arith.addf %126, %129 : vector<8x256xf32>
    %c9 = arith.constant 9 : index
    %c0_111 = arith.constant 0 : index
    %c0_112 = arith.constant 0 : index
    %131 = vector.load %arg6[%c9, %c0_111, %c0_112] : memref<10x48x256xbf16, #tpu.memory_space<vmem>>, vector<1x48x256xbf16>
    %132 = vector.shape_cast %131 : vector<1x48x256xbf16> to vector<48x256xbf16>
    %cst_113 = arith.constant dense<0.000000e+00> : vector<8x256xf32>
    %133 = tpu.matmul %10, %132, %cst_113 {dimension_numbers = #tpu.dot_dimension_numbers<[1], [0], [0], [1], [0, 0, 1, 1], [], []>} : vector<8x48xbf16>, vector<48x256xbf16>, vector<8x256xf32> -> vector<8x256xf32>
    %134 = arith.addf %130, %133 : vector<8x256xf32>
    %135 = vector.broadcast %11 : vector<8x1xf32> to vector<8x256xf32>
    %136 = arith.addf %134, %135 : vector<8x256xf32>
    %c0_114 = arith.constant 0 : index
    %c0_115 = arith.constant 0 : index
    %c1792 = arith.constant 1792 : index
    %137 = vector.load %arg5[%c0_114, %c0_115, %c1792] : memref<1x8x2048xf32, #tpu.memory_space<vmem>>, vector<1x8x256xf32>
    %138 = vector.shape_cast %137 : vector<1x8x256xf32> to vector<8x256xf32>
    %139 = vector.shape_cast %136 : vector<8x256xf32> to vector<1x8x256xf32>
    tpu.vector_store %arg5[%c0_114, %c0_115, %c1792], %139 {strides = array<i32>} : memref<1x8x2048xf32, #tpu.memory_space<vmem>>, vector<1x8x256xf32>,
    return
  }
  func.func @transform_1(%arg0: i32, %arg1: i32) -> (i32, i32, i32) {
    %c0_i32 = arith.constant 0 : i32
    %c0_i32_0 = arith.constant 0 : i32
    %c0_i32_1 = arith.constant 0 : i32
    %c0_i32_2 = arith.constant 0 : i32
    return %c0_i32, %c0_i32_0, %c0_i32_1 : i32, i32, i32
  }
  func.func @transform_2(%arg0: i32, %arg1: i32) -> (i32, i32) {
    %c0_i32 = arith.constant 0 : i32
    %c0_i32_0 = arith.constant 0 : i32
    %c0_i32_1 = arith.constant 0 : i32
    return %c0_i32, %c0_i32_0 : i32, i32
  }
  func.func @transform_3(%arg0: i32, %arg1: i32) -> (i32, i32, i32) {
    %c0_i32 = arith.constant 0 : i32
    %c0_i32_0 = arith.constant 0 : i32
    return %arg0, %c0_i32, %arg1 : i32, i32, i32
  }
}

</mosaic_0001>

<llo_original>
// kernel: conv3d_3x3x3_pallas.1
$region0: #{conv3d_3x3x3_pallas.1}
  #allocation0 [shape = 'u32[]', space=smem, size = 0x4, offset = 0x4, fixed_abs, tag = 'smem constant byte address 0x4 - core index']
  #allocation1 [shape = 'u32[144,128]{1,0:T(1,128)}', space=vmem, size = 0x12000, scoped, tag = 'internal scratch']
  #allocation2 [shape = 'bf16[10,48,256]{2,1,0:T(16,128)(2,1)}', space=vmem, size = 0x3c000, scoped, tag = 'scratch operand']
  #allocation3 [shape = 's32[1]{0}', space=sflag, size = 0x4, scoped, tag = 'scratch operand']
  #allocation4 [shape = 's32[]', space=sflag, size = 0x4, offset = 0, fixed_abs, tag = 'sflag constant byte address 0x0 - dummy sync flag']
  %s0 = inlined_call_operand.vmem [shape: bf16[2,18,48,256], index: 0, kind: input, shape index: {}]
  %s1 = inlined_call_operand.vmem [shape: bf16[3,8,48], index: 1, kind: input, shape index: {}]
  %s2 = inlined_call_operand.vmem [shape: f32[8,1], index: 2, kind: input, shape index: {}]
  %s3 = inlined_call_operand.vmem [shape: f32[2,8,4096], index: 3, kind: output, shape index: {}]
  %s4 = sld [smem:[#allocation0]]
  $region78: #{conv3d_3x3x3_pallas.1} parent=0
    _
  %s6 = ssub.s32 1, %s4
  %s7 = scalar_select 0, %s6, %s4
  loop: start=0, step=1, limit=6
  $region2: #{conv3d_3x3x3_pallas.1} parent=0 // loop_pre_header
    _
  $region3: #{conv3d_3x3x3_pallas.1} parent=0 // loop_header
    %s9 = sphi 0, %s13
    %p10 = scmp.ge.s32.totalorder %s9, 6
    %s16 = sphi 0, %s28
    %s17 = sphi 0, %s24
    %s18 = sphi 0, %s16
    %s19 = sphi 0, %s17
    %s20 = sphi 0, %s18
    %s21 = sphi 0, %s19
    %s29 = sphi 0, %s29
    %s31 = sphi 0, %s29
    %s32 = sphi 0, %s31
    %s46 = sphi 0, %s32
    %s50 = sphi 0, %s50
    %s52 = sphi 0, %s50
    %s53 = sphi 0, %s52
    %s67 = sphi 0, %s53
    %s75 = sphi 0, %s77
    %s78 = sphi 0, %s75
    %s79 = sphi 0, %s78
    %s95 = sphi 0, %s79
  $region4: #{conv3d_3x3x3_pallas.1} parent=0 // loop_header_branch
    %12 = sbr.rel (%p10) target = $region8
  $region5: #{conv3d_3x3x3_pallas.1} parent=0 // loop_body
    %s14 = ssub.s32 %s9, 1
    %s15 = ssub.s32 %s9, 2
    %s22 = sadd.s32 1, %s17
    %p23 = scmp.ge.s32.totalorder %s22, 2
    %s24 = scalar_select %p23, 0, %s22
    %s25 = sadd.s32 1, %s16
    %s26 = scalar_select %p23, %s25, %s16
    %p27 = scmp.ge.s32.totalorder %s26, 2
    %s28 = scalar_select %p27, 0, %s26
    %s30 = sadd.s32 %s29, 1
    %p33 = scmp.eq.s32.totalorder %s9, 3
    %p34 = scmp.ne.s32.totalorder %s29, %s31
    %p35 = scmp.eq.s32.totalorder %s9, 0
    %p36 = por %p34, %p35
    %p37 = scmp.ne.s32.totalorder %s29, %s31
    %p38 = scmp.eq.s32.totalorder %s14, 3
    %p39 = por %p37, %p38
    %p40 = scmp.ne.s32.totalorder %s31, %s32
    %p41 = scmp.eq.s32.totalorder %s14, 0
    %p42 = por %p40, %p41
    %p43 = scmp.ne.s32.totalorder %s31, %s32
    %p44 = scmp.eq.s32.totalorder %s15, 3
    %p45 = por %p43, %p44
    %p47 = scmp.ne.s32.totalorder %s32, %s46
    %p48 = scmp.eq.s32.totalorder %s15, 0
    %p49 = por %p47, %p48
    %s51 = sadd.s32 %s50, 1
    %p54 = scmp.eq.s32.totalorder %s9, 3
    %p55 = scmp.ne.s32.totalorder %s50, %s52
    %p56 = scmp.eq.s32.totalorder %s9, 0
    %p57 = por %p55, %p56
    %p58 = scmp.ne.s32.totalorder %s50, %s52
    %p59 = scmp.eq.s32.totalorder %s14, 3
    %p60 = por %p58, %p59
    %p61 = scmp.ne.s32.totalorder %s52, %s53
    %p62 = scmp.eq.s32.totalorder %s14, 0
    %p63 = por %p61, %p62
    %p64 = scmp.ne.s32.totalorder %s52, %s53
    %p65 = scmp.eq.s32.totalorder %s15, 3
    %p66 = por %p64, %p65
    %p68 = scmp.ne.s32.totalorder %s53, %s67
    %p69 = scmp.eq.s32.totalorder %s15, 0
    %p70 = por %p68, %p69
    %s71 = ssub.s32 %s16, %s28
    %s72 = ssub.s32 %s17, %s24
    %s73 = sor.u32 %s71, %s72
    %p74 = scmp.eq.s32.totalorder %s73, 0
    %s76 = sadd.s32 %s75, 1
    %s77 = scalar_select %p74, %s75, %s76
    %p80 = pneg %p74
    %p81 = scmp.eq.s32.totalorder %s9, 3
    %p82 = por %p80, %p81
    %p83 = scmp.ne.s32.totalorder %s75, %s78
    %p84 = scmp.eq.s32.totalorder %s9, 0
    %p85 = por %p83, %p84
    %p86 = scmp.ne.s32.totalorder %s75, %s78
    %p87 = scmp.eq.s32.totalorder %s14, 3
    %p88 = por %p86, %p87
    %p89 = scmp.ne.s32.totalorder %s78, %s79
    %p90 = scmp.eq.s32.totalorder %s14, 0
    %p91 = por %p89, %p90
    %p92 = scmp.ne.s32.totalorder %s78, %s79
    %p93 = scmp.eq.s32.totalorder %s15, 3
    %p94 = por %p92, %p93
    %p96 = scmp.ne.s32.totalorder %s79, %s95
    %p97 = scmp.eq.s32.totalorder %s15, 0
    %p98 = por %p96, %p97
    %p99 = scmp.le.s32.totalorder 1, %s9
    %p100 = scmp.lt.s32.totalorder %s9, 5
    %p101 = pnand %p99, %p100
    %p102 = pneg %p101
    // Predicated region
    $region9: #{conv3d_3x3x3_pallas.1} parent=5 // pred_check
      _
    $region10: #{conv3d_3x3x3_pallas.1} parent=5 // pred_check_branch
      %104 = sbr.rel (%p101) target = $region12
    $region11: #{conv3d_3x3x3_pallas.1} parent=5 // pred_region
      %s105 = ssub.s32 %s9, 1
      // Predicated region
      $region13: #{conv3d_3x3x3_pallas.1} parent=11 // pred_check
        %p106 = pneg %p42
      $region14: #{conv3d_3x3x3_pallas.1} parent=11 // pred_check_branch
        %108 = sbr.rel (%p106) target = $region16
      $region15: #{conv3d_3x3x3_pallas.1} parent=11 // pred_region
        _
      $region16: #{conv3d_3x3x3_pallas.1} parent=11 // pred_fallthru
        _
      // Predicated region
      $region17: #{conv3d_3x3x3_pallas.1} parent=11 // pred_check
        %p109 = pneg %p63
      $region18: #{conv3d_3x3x3_pallas.1} parent=11 // pred_check_branch
        %111 = sbr.rel (%p109) target = $region20
      $region19: #{conv3d_3x3x3_pallas.1} parent=11 // pred_region
        _
      $region20: #{conv3d_3x3x3_pallas.1} parent=11 // pred_fallthru
        _
    $region12: #{conv3d_3x3x3_pallas.1} parent=5 // pred_fallthru
      _
    %p112 = scmp.lt.s32.totalorder %s9, 4
    // Predicated region
    $region21: #{conv3d_3x3x3_pallas.1} parent=5 // pred_check
      %p113 = pneg %p112
    $region22: #{conv3d_3x3x3_pallas.1} parent=5 // pred_check_branch
      %115 = sbr.rel (%p113) target = $region24
    $region23: #{conv3d_3x3x3_pallas.1} parent=5 // pred_region
      _
    $region24: #{conv3d_3x3x3_pallas.1} parent=5 // pred_fallthru
      _
    %p116 = scmp.le.s32.totalorder 1, %s9
    %p117 = scmp.lt.s32.totalorder %s9, 5
    %p118 = pnand %p116, %p117
    %p119 = pneg %p118
    // Predicated region
    $region25: #{conv3d_3x3x3_pallas.1} parent=5 // pred_check
      _
    $region26: #{conv3d_3x3x3_pallas.1} parent=5 // pred_check_branch
      %121 = sbr.rel (%p118) target = $region28
    $region27: #{conv3d_3x3x3_pallas.1} parent=5 // pred_region
      %s122 = ssub.s32 %s9, 1
      %p123 = pneg %p42
      %p124 = pneg %p39
      %p125 = pneg %p63
      %p126 = pneg %p60
      %p127 = pneg %p91
      %p128 = pneg %p88
      %s129 = smul.u32 16, %s19
      %p130 = scmp.lt.s32.totalorder %s18, 1
      %s131 = scalar_select %p130, %s18, 1
      %p132 = scmp.lt.s32.totalorder %s129, 31
      %s133 = scalar_select %p132, %s129, 31
      %s134 = smul.addr %s131, 32
      %s135 = sadd.s32 %s133, %s134
      %s136 = smul.addr %s135, 8
      %s137 = scalar_lea.vmem %s3, %s136
      %s138 = smul.u32 16, %s19
      %p139 = scmp.lt.s32.totalorder %s18, 1
      %s140 = scalar_select %p139, %s18, 1
      %p141 = scmp.lt.s32.totalorder %s138, 31
      %s142 = scalar_select %p141, %s138, 31
      %s143 = smul.addr %s140, 32
      %s144 = sadd.s32 %s142, %s143
      %s145 = smul.addr %s144, 8
      %s146 = scalar_lea.vmem %s3, %s145
      %s147 = smul.u32 16, %s19
      %s149 = smul.u32 %s19, 8
      %s150 = smul.u32 %s149, 12
      %s151 = smul.u32 %s18, 216
      %s152 = sadd.s32 %s150, %s151
      %s153 = smul.addr %s152, 4
      %s154 = scalar_lea.vmem %s0, %s153
      %p156 = scmp.lt.u32.totalorder 4, 8
      %p157 = pneg %p156
      // Predicated region
      $region29: #{conv3d_3x3x3_pallas.1} parent=27 // pred_check
        _
      $region30: #{conv3d_3x3x3_pallas.1} parent=27 // pred_check_branch
        %159 = sbr.rel (%p156) target = $region32
      $region31: #{conv3d_3x3x3_pallas.1} parent=27 // pred_region
        %s412 = sand.u32 4, 7
        %p413 = scmp.eq.s32.totalorder %s412, 0
        %p414 = pneg %p413
        // Predicated region
        $region44: #{conv3d_3x3x3_pallas.1} parent=31 // pred_check
          _
        $region45: #{conv3d_3x3x3_pallas.1} parent=31 // pred_check_branch
          %416 = sbr.rel (%p413) target = $region47
        $region46: #{conv3d_3x3x3_pallas.1} parent=31 // pred_region
          %s417 = sand.u32 4, 7
          %s418 = ssub.s32 4, %s417
          %s419 = scalar_lea.vmem %s154, %s418
          %s420 = ssub.s32 4, %s417
          %s421 = scalar_lea.vmem [#allocation2], %s420
          loop: start=0, step=1, limit=1
          $region48: #{conv3d_3x3x3_pallas.1} parent=46 // loop_pre_header
            _
          $region49: #{conv3d_3x3x3_pallas.1} parent=46 // loop_header
            %s423 = sphi 0, %s427
            %p424 = scmp.ge.s32.totalorder %s423, 1
            %s428 = sphi %s154, %s154
            %s429 = sphi [#allocation2], [#allocation2]
          $region50: #{conv3d_3x3x3_pallas.1} parent=46 // loop_header_branch
            %426 = sbr.rel (%p424) target = $region54
          $region51: #{conv3d_3x3x3_pallas.1} parent=46 // loop_body
            _
          $region52: #{conv3d_3x3x3_pallas.1} parent=46 // loop_footer
            %s427 = sadd.s32 1, %s423
          $region53: #{conv3d_3x3x3_pallas.1} parent=46 // loop_footer_branch
            %422 = sbr.rel target = $region49
          $region54: #{conv3d_3x3x3_pallas.1} parent=46 // loop_exit
            _
          %s430 = sshllo.u32 0, %s417
          loop: start=0, step=1, limit=1
          $region55: #{conv3d_3x3x3_pallas.1} parent=46 // loop_pre_header
            _
          $region56: #{conv3d_3x3x3_pallas.1} parent=46 // loop_header
            %s432 = sphi 0, %s436
            %p433 = scmp.ge.s32.totalorder %s432, 1
            %s437 = sphi %s419, %s419
            %s438 = sphi %s421, %s421
          $region57: #{conv3d_3x3x3_pallas.1} parent=46 // loop_header_branch
            %435 = sbr.rel (%p433) target = $region61
          $region58: #{conv3d_3x3x3_pallas.1} parent=46 // loop_body
            %v439 = vld [vmem:[%s437] sm:%s430]
            %440 = vst [vmem:[%s438] sm:%s430] %v439
            %v441 = vld [vmem:[%s437 + $0x8] sm:%s430]
            %442 = vst [vmem:[%s438 + $0x4] sm:%s430] %v441
            %v443 = vld [vmem:[%s437 + $0x4] sm:%s430]
            %444 = vst [vmem:[%s438 + $0x8] sm:%s430] %v443
            %v445 = vld [vmem:[%s437 + $0xc] sm:%s430]
            %446 = vst [vmem:[%s438 + $0xc] sm:%s430] %v445
            %v447 = vld [vmem:[%s437 + $0x10] sm:%s430]
            %448 = vst [vmem:[%s438 + $0x10] sm:%s430] %v447
            %v449 = vld [vmem:[%s437 + $0x18] sm:%s430]
            %450 = vst [vmem:[%s438 + $0x14] sm:%s430] %v449
            %v451 = vld [vmem:[%s437 + $0x14] sm:%s430]
            %452 = vst [vmem:[%s438 + $0x18] sm:%s430] %v451
            %v453 = vld [vmem:[%s437 + $0x1c] sm:%s430]
            %454 = vst [vmem:[%s438 + $0x1c] sm:%s430] %v453
            %v455 = vld [vmem:[%s437 + $0x20] sm:%s430]
            %456 = vst [vmem:[%s438 + $0x20] sm:%s430] %v455
            %v457 = vld [vmem:[%s437 + $0x28] sm:%s430]
            %458 = vst [vmem:[%s438 + $0x24] sm:%s430] %v457
            %v459 = vld [vmem:[%s437 + $0x24] sm:%s430]
            %460 = vst [vmem:[%s438 + $0x28] sm:%s430] %v459
            %v461 = vld [vmem:[%s437 + $0x2c] sm:%s430]
            %462 = vst [vmem:[%s438 + $0x2c] sm:%s430] %v461
            %v463 = vld [vmem:[%s437 + $0x30] sm:%s430]
            %464 = vst [vmem:[%s438 + $0x30] sm:%s430] %v463
            %v465 = vld [vmem:[%s437 + $0x38] sm:%s430]
            %466 = vst [vmem:[%s438 + $0x34] sm:%s430] %v465
            %v467 = vld [vmem:[%s437 + $0x34] sm:%s430]
            %468 = vst [vmem:[%s438 + $0x38] sm:%s430] %v467
            %v469 = vld [vmem:[%s437 + $0x3c] sm:%s430]
            %470 = vst [vmem:[%s438 + $0x3c] sm:%s430] %v469
            %v471 = vld [vmem:[%s437 + $0x40] sm:%s430]
            %472 = vst [vmem:[%s438 + $0x40] sm:%s430] %v471
            %v473 = vld [vmem:[%s437 + $0x48] sm:%s430]
            %474 = vst [vmem:[%s438 + $0x44] sm:%s430] %v473
            %v475 = vld [vmem:[%s437 + $0x44] sm:%s430]
            %476 = vst [vmem:[%s438 + $0x48] sm:%s430] %v475
            %v477 = vld [vmem:[%s437 + $0x4c] sm:%s430]
            %478 = vst [vmem:[%s438 + $0x4c] sm:%s430] %v477
            %v479 = vld [vmem:[%s437 + $0x50] sm:%s430]
            %480 = vst [vmem:[%s438 + $0x50] sm:%s430] %v479
            %v481 = vld [vmem:[%s437 + $0x58] sm:%s430]
            %482 = vst [vmem:[%s438 + $0x54] sm:%s430] %v481
            %v483 = vld [vmem:[%s437 + $0x54] sm:%s430]
            %484 = vst [vmem:[%s438 + $0x58] sm:%s430] %v483
            %v485 = vld [vmem:[%s437 + $0x5c] sm:%s430]
            %486 = vst [vmem:[%s438 + $0x5c] sm:%s430] %v485
            %v487 = vld [vmem:[%s437 + $0x60] sm:%s430]
            %488 = vst [vmem:[%s438 + $0x60] sm:%s430] %v487
            %v489 = vld [vmem:[%s437 + $0x68] sm:%s430]
            %490 = vst [vmem:[%s438 + $0x64] sm:%s430] %v489
            %v491 = vld [vmem:[%s437 + $0x64] sm:%s430]
            %492 = vst [vmem:[%s438 + $0x68] sm:%s430] %v491
            %v493 = vld [vmem:[%s437 + $0x6c] sm:%s430]
            %494 = vst [vmem:[%s438 + $0x6c] sm:%s430] %v493
            %v495 = vld [vmem:[%s437 + $0x70] sm:%s430]
            %496 = vst [vmem:[%s438 + $0x70] sm:%s430] %v495
            %v497 = vld [vmem:[%s437 + $0x78] sm:%s430]
            %498 = vst [vmem:[%s438 + $0x74] sm:%s430] %v497
            %v499 = vld [vmem:[%s437 + $0x74] sm:%s430]
            %500 = vst [vmem:[%s438 + $0x78] sm:%s430] %v499
            %v501 = vld [vmem:[%s437 + $0x7c] sm:%s430]
            %502 = vst [vmem:[%s438 + $0x7c] sm:%s430] %v501
            %v503 = vld [vmem:[%s437 + $0x80] sm:%s430]
            %504 = vst [vmem:[%s438 + $0x80] sm:%s430] %v503
            %v505 = vld [vmem:[%s437 + $0x88] sm:%s430]
            %506 = vst [vmem:[%s438 + $0x84] sm:%s430] %v505
            %v507 = vld [vmem:[%s437 + $0x84] sm:%s430]
            %508 = vst [vmem:[%s438 + $0x88] sm:%s430] %v507
            %v509 = vld [vmem:[%s437 + $0x8c] sm:%s430]
            %510 = vst [vmem:[%s438 + $0x8c] sm:%s430] %v509
            %v511 = vld [vmem:[%s437 + $0x90] sm:%s430]
            %512 = vst [vmem:[%s438 + $0x90] sm:%s430] %v511
            %v513 = vld [vmem:[%s437 + $0x98] sm:%s430]
            %514 = vst [vmem:[%s438 + $0x94] sm:%s430] %v513
            %v515 = vld [vmem:[%s437 + $0x94] sm:%s430]
            %516 = vst [vmem:[%s438 + $0x98] sm:%s430] %v515
            %v517 = vld [vmem:[%s437 + $0x9c] sm:%s430]
            %518 = vst [vmem:[%s438 + $0x9c] sm:%s430] %v517
            %v519 = vld [vmem:[%s437 + $0xa0] sm:%s430]
            %520 = vst [vmem:[%s438 + $0xa0] sm:%s430] %v519
            %v521 = vld [vmem:[%s437 + $0xa8] sm:%s430]
            %522 = vst [vmem:[%s438 + $0xa4] sm:%s430] %v521
            %v523 = vld [vmem:[%s437 + $0xa4] sm:%s430]
            %524 = vst [vmem:[%s438 + $0xa8] sm:%s430] %v523
            %v525 = vld [vmem:[%s437 + $0xac] sm:%s430]
            %526 = vst [vmem:[%s438 + $0xac] sm:%s430] %v525
            %v527 = vld [vmem:[%s437 + $0xb0] sm:%s430]
            %528 = vst [vmem:[%s438 + $0xb0] sm:%s430] %v527
            %v529 = vld [vmem:[%s437 + $0xb8] sm:%s430]
            %530 = vst [vmem:[%s438 + $0xb4] sm:%s430] %v529
            %v531 = vld [vmem:[%s437 + $0xb4] sm:%s430]
            %532 = vst [vmem:[%s438 + $0xb8] sm:%s430] %v531
            %v533 = vld [vmem:[%s437 + $0xbc] sm:%s430]
            %534 = vst [vmem:[%s438 + $0xbc] sm:%s430] %v533
            %v535 = vld [vmem:[%s437 + $0xc0] sm:%s430]
            %536 = vst [vmem:[%s438 + $0xc0] sm:%s430] %v535
            %v537 = vld [vmem:[%s437 + $0xc8] sm:%s430]
            %538 = vst [vmem:[%s438 + $0xc4] sm:%s430] %v537
            %v539 = vld [vmem:[%s437 + $0xc4] sm:%s430]
            %540 = vst [vmem:[%s438 + $0xc8] sm:%s430] %v539
            %v541 = vld [vmem:[%s437 + $0xcc] sm:%s430]
            %542 = vst [vmem:[%s438 + $0xcc] sm:%s430] %v541
            %v543 = vld [vmem:[%s437 + $0xd0] sm:%s430]
            %544 = vst [vmem:[%s438 + $0xd0] sm:%s430] %v543
            %v545 = vld [vmem:[%s437 + $0xd8] sm:%s430]
            %546 = vst [vmem:[%s438 + $0xd4] sm:%s430] %v545
            %v547 = vld [vmem:[%s437 + $0xd4] sm:%s430]
            %548 = vst [vmem:[%s438 + $0xd8] sm:%s430] %v547
            %v549 = vld [vmem:[%s437 + $0xdc] sm:%s430]
            %550 = vst [vmem:[%s438 + $0xdc] sm:%s430] %v549
            %v551 = vld [vmem:[%s437 + $0xe0] sm:%s430]
            %552 = vst [vmem:[%s438 + $0xe0] sm:%s430] %v551
            %v553 = vld [vmem:[%s437 + $0xe8] sm:%s430]
            %554 = vst [vmem:[%s438 + $0xe4] sm:%s430] %v553
            %v555 = vld [vmem:[%s437 + $0xe4] sm:%s430]
            %556 = vst [vmem:[%s438 + $0xe8] sm:%s430] %v555
            %v557 = vld [vmem:[%s437 + $0xec] sm:%s430]
            %558 = vst [vmem:[%s438 + $0xec] sm:%s430] %v557
            %v559 = vld [vmem:[%s437 + $0xf0] sm:%s430]
            %560 = vst [vmem:[%s438 + $0xf0] sm:%s430] %v559
            %v561 = vld [vmem:[%s437 + $0xf8] sm:%s430]
            %562 = vst [vmem:[%s438 + $0xf4] sm:%s430] %v561
            %v563 = vld [vmem:[%s437 + $0xf4] sm:%s430]
            %564 = vst [vmem:[%s438 + $0xf8] sm:%s430] %v563
            %v565 = vld [vmem:[%s437 + $0xfc] sm:%s430]
            %566 = vst [vmem:[%s438 + $0xfc] sm:%s430] %v565
            %v567 = vld [vmem:[%s437 + $0x100] sm:%s430]
            %568 = vst [vmem:[%s438 + $0x100] sm:%s430] %v567
            %v569 = vld [vmem:[%s437 + $0x108] sm:%s430]
            %570 = vst [vmem:[%s438 + $0x104] sm:%s430] %v569
            %v571 = vld [vmem:[%s437 + $0x104] sm:%s430]
            %572 = vst [vmem:[%s438 + $0x108] sm:%s430] %v571
            %v573 = vld [vmem:[%s437 + $0x10c] sm:%s430]
            %574 = vst [vmem:[%s438 + $0x10c] sm:%s430] %v573
            %v575 = vld [vmem:[%s437 + $0x110] sm:%s430]
            %576 = vst [vmem:[%s438 + $0x110] sm:%s430] %v575
            %v577 = vld [vmem:[%s437 + $0x118] sm:%s430]
            %578 = vst [vmem:[%s438 + $0x114] sm:%s430] %v577
            %v579 = vld [vmem:[%s437 + $0x114] sm:%s430]
            %580 = vst [vmem:[%s438 + $0x118] sm:%s430] %v579
            %v581 = vld [vmem:[%s437 + $0x11c] sm:%s430]
            %582 = vst [vmem:[%s438 + $0x11c] sm:%s430] %v581
            %v583 = vld [vmem:[%s437 + $0x120] sm:%s430]
            %584 = vst [vmem:[%s438 + $0x120] sm:%s430] %v583
            %v585 = vld [vmem:[%s437 + $0x128] sm:%s430]
            %586 = vst [vmem:[%s438 + $0x124] sm:%s430] %v585
            %v587 = vld [vmem:[%s437 + $0x124] sm:%s430]
            %588 = vst [vmem:[%s438 + $0x128] sm:%s430] %v587
            %v589 = vld [vmem:[%s437 + $0x12c] sm:%s430]
            %590 = vst [vmem:[%s438 + $0x12c] sm:%s430] %v589
            %v591 = vld [vmem:[%s437 + $0x130] sm:%s430]
            %592 = vst [vmem:[%s438 + $0x130] sm:%s430] %v591
            %v593 = vld [vmem:[%s437 + $0x138] sm:%s430]
            %594 = vst [vmem:[%s438 + $0x134] sm:%s430] %v593
            %v595 = vld [vmem:[%s437 + $0x134] sm:%s430]
            %596 = vst [vmem:[%s438 + $0x138] sm:%s430] %v595
            %v597 = vld [vmem:[%s437 + $0x13c] sm:%s430]
            %598 = vst [vmem:[%s438 + $0x13c] sm:%s430] %v597
            %v599 = vld [vmem:[%s437 + $0x140] sm:%s430]
            %600 = vst [vmem:[%s438 + $0x140] sm:%s430] %v599
            %v601 = vld [vmem:[%s437 + $0x148] sm:%s430]
            %602 = vst [vmem:[%s438 + $0x144] sm:%s430] %v601
            %v603 = vld [vmem:[%s437 + $0x144] sm:%s430]
            %604 = vst [vmem:[%s438 + $0x148] sm:%s430] %v603
            %v605 = vld [vmem:[%s437 + $0x14c] sm:%s430]
            %606 = vst [vmem:[%s438 + $0x14c] sm:%s430] %v605
            %v607 = vld [vmem:[%s437 + $0x150] sm:%s430]
            %608 = vst [vmem:[%s438 + $0x150] sm:%s430] %v607
            %v609 = vld [vmem:[%s437 + $0x158] sm:%s430]
            %610 = vst [vmem:[%s438 + $0x154] sm:%s430] %v609
            %v611 = vld [vmem:[%s437 + $0x154] sm:%s430]
            %612 = vst [vmem:[%s438 + $0x158] sm:%s430] %v611
            %v613 = vld [vmem:[%s437 + $0x15c] sm:%s430]
            %614 = vst [vmem:[%s438 + $0x15c] sm:%s430] %v613
            %v615 = vld [vmem:[%s437 + $0x160] sm:%s430]
            %616 = vst [vmem:[%s438 + $0x160] sm:%s430] %v615
            %v617 = vld [vmem:[%s437 + $0x168] sm:%s430]
            %618 = vst [vmem:[%s438 + $0x164] sm:%s430] %v617
            %v619 = vld [vmem:[%s437 + $0x164] sm:%s430]
            %620 = vst [vmem:[%s438 + $0x168] sm:%s430] %v619
            %v621 = vld [vmem:[%s437 + $0x16c] sm:%s430]
            %622 = vst [vmem:[%s438 + $0x16c] sm:%s430] %v621
            %v623 = vld [vmem:[%s437 + $0x170] sm:%s430]
            %624 = vst [vmem:[%s438 + $0x170] sm:%s430] %v623
            %v625 = vld [vmem:[%s437 + $0x178] sm:%s430]
            %626 = vst [vmem:[%s438 + $0x174] sm:%s430] %v625
            %v627 = vld [vmem:[%s437 + $0x174] sm:%s430]
            %628 = vst [vmem:[%s438 + $0x178] sm:%s430] %v627
            %v629 = vld [vmem:[%s437 + $0x17c] sm:%s430]
            %630 = vst [vmem:[%s438 + $0x17c] sm:%s430] %v629
            %v631 = vld [vmem:[%s437 + $0x180] sm:%s430]
            %632 = vst [vmem:[%s438 + $0x180] sm:%s430] %v631
            %v633 = vld [vmem:[%s437 + $0x188] sm:%s430]
            %634 = vst [vmem:[%s438 + $0x184] sm:%s430] %v633
            %v635 = vld [vmem:[%s437 + $0x184] sm:%s430]
            %636 = vst [vmem:[%s438 + $0x188] sm:%s430] %v635
            %v637 = vld [vmem:[%s437 + $0x18c] sm:%s430]
            %638 = vst [vmem:[%s438 + $0x18c] sm:%s430] %v637
            %v639 = vld [vmem:[%s437 + $0x190] sm:%s430]
            %640 = vst [vmem:[%s438 + $0x190] sm:%s430] %v639
            %v641 = vld [vmem:[%s437 + $0x198] sm:%s430]
            %642 = vst [vmem:[%s438 + $0x194] sm:%s430] %v641
            %v643 = vld [vmem:[%s437 + $0x194] sm:%s430]
            %644 = vst [vmem:[%s438 + $0x198] sm:%s430] %v643
            %v645 = vld [vmem:[%s437 + $0x19c] sm:%s430]
            %646 = vst [vmem:[%s438 + $0x19c] sm:%s430] %v645
            %v647 = vld [vmem:[%s437 + $0x1a0] sm:%s430]
            %648 = vst [vmem:[%s438 + $0x1a0] sm:%s430] %v647
            %v649 = vld [vmem:[%s437 + $0x1a8] sm:%s430]
            %650 = vst [vmem:[%s438 + $0x1a4] sm:%s430] %v649
            %v651 = vld [vmem:[%s437 + $0x1a4] sm:%s430]
            %652 = vst [vmem:[%s438 + $0x1a8] sm:%s430] %v651
            %v653 = vld [vmem:[%s437 + $0x1ac] sm:%s430]
            %654 = vst [vmem:[%s438 + $0x1ac] sm:%s430] %v653
            %v655 = vld [vmem:[%s437 + $0x1b0] sm:%s430]
            %656 = vst [vmem:[%s438 + $0x1b0] sm:%s430] %v655
            %v657 = vld [vmem:[%s437 + $0x1b8] sm:%s430]
            %658 = vst [vmem:[%s438 + $0x1b4] sm:%s430] %v657
            %v659 = vld [vmem:[%s437 + $0x1b4] sm:%s430]
            %660 = vst [vmem:[%s438 + $0x1b8] sm:%s430] %v659
            %v661 = vld [vmem:[%s437 + $0x1bc] sm:%s430]
            %662 = vst [vmem:[%s438 + $0x1bc] sm:%s430] %v661
            %v663 = vld [vmem:[%s437 + $0x1c0] sm:%s430]
            %664 = vst [vmem:[%s438 + $0x1c0] sm:%s430] %v663
            %v665 = vld [vmem:[%s437 + $0x1c8] sm:%s430]
            %666 = vst [vmem:[%s438 + $0x1c4] sm:%s430] %v665
            %v667 = vld [vmem:[%s437 + $0x1c4] sm:%s430]
            %668 = vst [vmem:[%s438 + $0x1c8] sm:%s430] %v667
            %v669 = vld [vmem:[%s437 + $0x1cc] sm:%s430]
            %670 = vst [vmem:[%s438 + $0x1cc] sm:%s430] %v669
            %v671 = vld [vmem:[%s437 + $0x1d0] sm:%s430]
            %672 = vst [vmem:[%s438 + $0x1d0] sm:%s430] %v671
            %v673 = vld [vmem:[%s437 + $0x1d8] sm:%s430]
            %674 = vst [vmem:[%s438 + $0x1d4] sm:%s430] %v673
            %v675 = vld [vmem:[%s437 + $0x1d4] sm:%s430]
            %676 = vst [vmem:[%s438 + $0x1d8] sm:%s430] %v675
            %v677 = vld [vmem:[%s437 + $0x1dc] sm:%s430]
            %678 = vst [vmem:[%s438 + $0x1dc] sm:%s430] %v677
          $region59: #{conv3d_3x3x3_pallas.1} parent=46 // loop_footer
            %s436 = sadd.s32 1, %s432
          $region60: #{conv3d_3x3x3_pallas.1} parent=46 // loop_footer_branch
            %431 = sbr.rel target = $region56
          $region61: #{conv3d_3x3x3_pallas.1} parent=46 // loop_exit
            _
        $region47: #{conv3d_3x3x3_pallas.1} parent=31 // pred_fallthru
          _
      $region32: #{conv3d_3x3x3_pallas.1} parent=27 // pred_fallthru
        _
      // Predicated region
      $region33: #{conv3d_3x3x3_pallas.1} parent=27 // pred_check
        %p160 = pneg %p156
      $region34: #{conv3d_3x3x3_pallas.1} parent=27 // pred_check_branch
        %162 = sbr.rel (%p160) target = $region36
      $region35: #{conv3d_3x3x3_pallas.1} parent=27 // pred_region
        %s163 = sshllo.u32 0, 4
        loop: start=0, step=1, limit=1
        $region37: #{conv3d_3x3x3_pallas.1} parent=35 // loop_pre_header
          _
        $region38: #{conv3d_3x3x3_pallas.1} parent=35 // loop_header
          %s165 = sphi 0, %s169
          %p166 = scmp.ge.s32.totalorder %s165, 1
          %s170 = sphi %s154, %s154
          %s171 = sphi [#allocation2], [#allocation2]
        $region39: #{conv3d_3x3x3_pallas.1} parent=35 // loop_header_branch
          %168 = sbr.rel (%p166) target = $region43
        $region40: #{conv3d_3x3x3_pallas.1} parent=35 // loop_body
          %v172 = vld [vmem:[%s170] sm:%s163]
          %173 = vst [vmem:[%s171] sm:%s163] %v172
          %v174 = vld [vmem:[%s170 + $0x8] sm:%s163]
          %175 = vst [vmem:[%s171 + $0x4] sm:%s163] %v174
          %v176 = vld [vmem:[%s170 + $0x4] sm:%s163]
          %177 = vst [vmem:[%s171 + $0x8] sm:%s163] %v176
          %v178 = vld [vmem:[%s170 + $0xc] sm:%s163]
          %179 = vst [vmem:[%s171 + $0xc] sm:%s163] %v178
          %v180 = vld [vmem:[%s170 + $0x10] sm:%s163]
          %181 = vst [vmem:[%s171 + $0x10] sm:%s163] %v180
          %v182 = vld [vmem:[%s170 + $0x18] sm:%s163]
          %183 = vst [vmem:[%s171 + $0x14] sm:%s163] %v182
          %v184 = vld [vmem:[%s170 + $0x14] sm:%s163]
          %185 = vst [vmem:[%s171 + $0x18] sm:%s163] %v184
          %v186 = vld [vmem:[%s170 + $0x1c] sm:%s163]
          %187 = vst [vmem:[%s171 + $0x1c] sm:%s163] %v186
          %v188 = vld [vmem:[%s170 + $0x20] sm:%s163]
          %189 = vst [vmem:[%s171 + $0x20] sm:%s163] %v188
          %v190 = vld [vmem:[%s170 + $0x28] sm:%s163]
          %191 = vst [vmem:[%s171 + $0x24] sm:%s163] %v190
          %v192 = vld [vmem:[%s170 + $0x24] sm:%s163]
          %193 = vst [vmem:[%s171 + $0x28] sm:%s163] %v192
          %v194 = vld [vmem:[%s170 + $0x2c] sm:%s163]
          %195 = vst [vmem:[%s171 + $0x2c] sm:%s163] %v194
          %v196 = vld [vmem:[%s170 + $0x30] sm:%s163]
          %197 = vst [vmem:[%s171 + $0x30] sm:%s163] %v196
          %v198 = vld [vmem:[%s170 + $0x38] sm:%s163]
          %199 = vst [vmem:[%s171 + $0x34] sm:%s163] %v198
          %v200 = vld [vmem:[%s170 + $0x34] sm:%s163]
          %201 = vst [vmem:[%s171 + $0x38] sm:%s163] %v200
          %v202 = vld [vmem:[%s170 + $0x3c] sm:%s163]
          %203 = vst [vmem:[%s171 + $0x3c] sm:%s163] %v202
          %v204 = vld [vmem:[%s170 + $0x40] sm:%s163]
          %205 = vst [vmem:[%s171 + $0x40] sm:%s163] %v204
          %v206 = vld [vmem:[%s170 + $0x48] sm:%s163]
          %207 = vst [vmem:[%s171 + $0x44] sm:%s163] %v206
          %v208 = vld [vmem:[%s170 + $0x44] sm:%s163]
          %209 = vst [vmem:[%s171 + $0x48] sm:%s163] %v208
          %v210 = vld [vmem:[%s170 + $0x4c] sm:%s163]
          %211 = vst [vmem:[%s171 + $0x4c] sm:%s163] %v210
          %v212 = vld [vmem:[%s170 + $0x50] sm:%s163]
          %213 = vst [vmem:[%s171 + $0x50] sm:%s163] %v212
          %v214 = vld [vmem:[%s170 + $0x58] sm:%s163]
          %215 = vst [vmem:[%s171 + $0x54] sm:%s163] %v214
          %v216 = vld [vmem:[%s170 + $0x54] sm:%s163]
          %217 = vst [vmem:[%s171 + $0x58] sm:%s163] %v216
          %v218 = vld [vmem:[%s170 + $0x5c] sm:%s163]
          %219 = vst [vmem:[%s171 + $0x5c] sm:%s163] %v218
          %v220 = vld [vmem:[%s170 + $0x60] sm:%s163]
          %221 = vst [vmem:[%s171 + $0x60] sm:%s163] %v220
          %v222 = vld [vmem:[%s170 + $0x68] sm:%s163]
          %223 = vst [vmem:[%s171 + $0x64] sm:%s163] %v222
          %v224 = vld [vmem:[%s170 + $0x64] sm:%s163]
          %225 = vst [vmem:[%s171 + $0x68] sm:%s163] %v224
          %v226 = vld [vmem:[%s170 + $0x6c] sm:%s163]
          %227 = vst [vmem:[%s171 + $0x6c] sm:%s163] %v226
          %v228 = vld [vmem:[%s170 + $0x70] sm:%s163]
          %229 = vst [vmem:[%s171 + $0x70] sm:%s163] %v228
          %v230 = vld [vmem:[%s170 + $0x78] sm:%s163]
          %231 = vst [vmem:[%s171 + $0x74] sm:%s163] %v230
          %v232 = vld [vmem:[%s170 + $0x74] sm:%s163]
          %233 = vst [vmem:[%s171 + $0x78] sm:%s163] %v232
          %v234 = vld [vmem:[%s170 + $0x7c] sm:%s163]
          %235 = vst [vmem:[%s171 + $0x7c] sm:%s163] %v234
          %v236 = vld [vmem:[%s170 + $0x80] sm:%s163]
          %237 = vst [vmem:[%s171 + $0x80] sm:%s163] %v236
          %v238 = vld [vmem:[%s170 + $0x88] sm:%s163]
          %239 = vst [vmem:[%s171 + $0x84] sm:%s163] %v238
          %v240 = vld [vmem:[%s170 + $0x84] sm:%s163]
          %241 = vst [vmem:[%s171 + $0x88] sm:%s163] %v240
          %v242 = vld [vmem:[%s170 + $0x8c] sm:%s163]
          %243 = vst [vmem:[%s171 + $0x8c] sm:%s163] %v242
          %v244 = vld [vmem:[%s170 + $0x90] sm:%s163]
          %245 = vst [vmem:[%s171 + $0x90] sm:%s163] %v244
          %v246 = vld [vmem:[%s170 + $0x98] sm:%s163]
          %247 = vst [vmem:[%s171 + $0x94] sm:%s163] %v246
          %v248 = vld [vmem:[%s170 + $0x94] sm:%s163]
          %249 = vst [vmem:[%s171 + $0x98] sm:%s163] %v248
          %v250 = vld [vmem:[%s170 + $0x9c] sm:%s163]
          %251 = vst [vmem:[%s171 + $0x9c] sm:%s163] %v250
          %v252 = vld [vmem:[%s170 + $0xa0] sm:%s163]
          %253 = vst [vmem:[%s171 + $0xa0] sm:%s163] %v252
          %v254 = vld [vmem:[%s170 + $0xa8] sm:%s163]
          %255 = vst [vmem:[%s171 + $0xa4] sm:%s163] %v254
          %v256 = vld [vmem:[%s170 + $0xa4] sm:%s163]
          %257 = vst [vmem:[%s171 + $0xa8] sm:%s163] %v256
          %v258 = vld [vmem:[%s170 + $0xac] sm:%s163]
          %259 = vst [vmem:[%s171 + $0xac] sm:%s163] %v258
          %v260 = vld [vmem:[%s170 + $0xb0] sm:%s163]
          %261 = vst [vmem:[%s171 + $0xb0] sm:%s163] %v260
          %v262 = vld [vmem:[%s170 + $0xb8] sm:%s163]
          %263 = vst [vmem:[%s171 + $0xb4] sm:%s163] %v262
          %v264 = vld [vmem:[%s170 + $0xb4] sm:%s163]
          %265 = vst [vmem:[%s171 + $0xb8] sm:%s163] %v264
          %v266 = vld [vmem:[%s170 + $0xbc] sm:%s163]
          %267 = vst [vmem:[%s171 + $0xbc] sm:%s163] %v266
          %v268 = vld [vmem:[%s170 + $0xc0] sm:%s163]
          %269 = vst [vmem:[%s171 + $0xc0] sm:%s163] %v268
          %v270 = vld [vmem:[%s170 + $0xc8] sm:%s163]
          %271 = vst [vmem:[%s171 + $0xc4] sm:%s163] %v270
          %v272 = vld [vmem:[%s170 + $0xc4] sm:%s163]
          %273 = vst [vmem:[%s171 + $0xc8] sm:%s163] %v272
          %v274 = vld [vmem:[%s170 + $0xcc] sm:%s163]
          %275 = vst [vmem:[%s171 + $0xcc] sm:%s163] %v274
          %v276 = vld [vmem:[%s170 + $0xd0] sm:%s163]
          %277 = vst [vmem:[%s171 + $0xd0] sm:%s163] %v276
          %v278 = vld [vmem:[%s170 + $0xd8] sm:%s163]
          %279 = vst [vmem:[%s171 + $0xd4] sm:%s163] %v278
          %v280 = vld [vmem:[%s170 + $0xd4] sm:%s163]
          %281 = vst [vmem:[%s171 + $0xd8] sm:%s163] %v280
          %v282 = vld [vmem:[%s170 + $0xdc] sm:%s163]
          %283 = vst [vmem:[%s171 + $0xdc] sm:%s163] %v282
          %v284 = vld [vmem:[%s170 + $0xe0] sm:%s163]
          %285 = vst [vmem:[%s171 + $0xe0] sm:%s163] %v284
          %v286 = vld [vmem:[%s170 + $0xe8] sm:%s163]
          %287 = vst [vmem:[%s171 + $0xe4] sm:%s163] %v286
          %v288 = vld [vmem:[%s170 + $0xe4] sm:%s163]
          %289 = vst [vmem:[%s171 + $0xe8] sm:%s163] %v288
          %v290 = vld [vmem:[%s170 + $0xec] sm:%s163]
          %291 = vst [vmem:[%s171 + $0xec] sm:%s163] %v290
          %v292 = vld [vmem:[%s170 + $0xf0] sm:%s163]
          %293 = vst [vmem:[%s171 + $0xf0] sm:%s163] %v292
          %v294 = vld [vmem:[%s170 + $0xf8] sm:%s163]
          %295 = vst [vmem:[%s171 + $0xf4] sm:%s163] %v294
          %v296 = vld [vmem:[%s170 + $0xf4] sm:%s163]
          %297 = vst [vmem:[%s171 + $0xf8] sm:%s163] %v296
          %v298 = vld [vmem:[%s170 + $0xfc] sm:%s163]
          %299 = vst [vmem:[%s171 + $0xfc] sm:%s163] %v298
          %v300 = vld [vmem:[%s170 + $0x100] sm:%s163]
          %301 = vst [vmem:[%s171 + $0x100] sm:%s163] %v300
          %v302 = vld [vmem:[%s170 + $0x108] sm:%s163]
          %303 = vst [vmem:[%s171 + $0x104] sm:%s163] %v302
          %v304 = vld [vmem:[%s170 + $0x104] sm:%s163]
          %305 = vst [vmem:[%s171 + $0x108] sm:%s163] %v304
          %v306 = vld [vmem:[%s170 + $0x10c] sm:%s163]
          %307 = vst [vmem:[%s171 + $0x10c] sm:%s163] %v306
          %v308 = vld [vmem:[%s170 + $0x110] sm:%s163]
          %309 = vst [vmem:[%s171 + $0x110] sm:%s163] %v308
          %v310 = vld [vmem:[%s170 + $0x118] sm:%s163]
          %311 = vst [vmem:[%s171 + $0x114] sm:%s163] %v310
          %v312 = vld [vmem:[%s170 + $0x114] sm:%s163]
          %313 = vst [vmem:[%s171 + $0x118] sm:%s163] %v312
          %v314 = vld [vmem:[%s170 + $0x11c] sm:%s163]
          %315 = vst [vmem:[%s171 + $0x11c] sm:%s163] %v314
          %v316 = vld [vmem:[%s170 + $0x120] sm:%s163]
          %317 = vst [vmem:[%s171 + $0x120] sm:%s163] %v316
          %v318 = vld [vmem:[%s170 + $0x128] sm:%s163]
          %319 = vst [vmem:[%s171 + $0x124] sm:%s163] %v318
          %v320 = vld [vmem:[%s170 + $0x124] sm:%s163]
          %321 = vst [vmem:[%s171 + $0x128] sm:%s163] %v320
          %v322 = vld [vmem:[%s170 + $0x12c] sm:%s163]
          %323 = vst [vmem:[%s171 + $0x12c] sm:%s163] %v322
          %v324 = vld [vmem:[%s170 + $0x130] sm:%s163]
          %325 = vst [vmem:[%s171 + $0x130] sm:%s163] %v324
          %v326 = vld [vmem:[%s170 + $0x138] sm:%s163]
          %327 = vst [vmem:[%s171 + $0x134] sm:%s163] %v326
          %v328 = vld [vmem:[%s170 + $0x134] sm:%s163]
          %329 = vst [vmem:[%s171 + $0x138] sm:%s163] %v328
          %v330 = vld [vmem:[%s170 + $0x13c] sm:%s163]
          %331 = vst [vmem:[%s171 + $0x13c] sm:%s163] %v330
          %v332 = vld [vmem:[%s170 + $0x140] sm:%s163]
          %333 = vst [vmem:[%s171 + $0x140] sm:%s163] %v332
          %v334 = vld [vmem:[%s170 + $0x148] sm:%s163]
          %335 = vst [vmem:[%s171 + $0x144] sm:%s163] %v334
          %v336 = vld [vmem:[%s170 + $0x144] sm:%s163]
          %337 = vst [vmem:[%s171 + $0x148] sm:%s163] %v336
          %v338 = vld [vmem:[%s170 + $0x14c] sm:%s163]
          %339 = vst [vmem:[%s171 + $0x14c] sm:%s163] %v338
          %v340 = vld [vmem:[%s170 + $0x150] sm:%s163]
          %341 = vst [vmem:[%s171 + $0x150] sm:%s163] %v340
          %v342 = vld [vmem:[%s170 + $0x158] sm:%s163]
          %343 = vst [vmem:[%s171 + $0x154] sm:%s163] %v342
          %v344 = vld [vmem:[%s170 + $0x154] sm:%s163]
          %345 = vst [vmem:[%s171 + $0x158] sm:%s163] %v344
          %v346 = vld [vmem:[%s170 + $0x15c] sm:%s163]
          %347 = vst [vmem:[%s171 + $0x15c] sm:%s163] %v346
          %v348 = vld [vmem:[%s170 + $0x160] sm:%s163]
          %349 = vst [vmem:[%s171 + $0x160] sm:%s163] %v348
          %v350 = vld [vmem:[%s170 + $0x168] sm:%s163]
          %351 = vst [vmem:[%s171 + $0x164] sm:%s163] %v350
          %v352 = vld [vmem:[%s170 + $0x164] sm:%s163]
          %353 = vst [vmem:[%s171 + $0x168] sm:%s163] %v352
          %v354 = vld [vmem:[%s170 + $0x16c] sm:%s163]
          %355 = vst [vmem:[%s171 + $0x16c] sm:%s163] %v354
          %v356 = vld [vmem:[%s170 + $0x170] sm:%s163]
          %357 = vst [vmem:[%s171 + $0x170] sm:%s163] %v356
          %v358 = vld [vmem:[%s170 + $0x178] sm:%s163]
          %359 = vst [vmem:[%s171 + $0x174] sm:%s163] %v358
          %v360 = vld [vmem:[%s170 + $0x174] sm:%s163]
          %361 = vst [vmem:[%s171 + $0x178] sm:%s163] %v360
          %v362 = vld [vmem:[%s170 + $0x17c] sm:%s163]
          %363 = vst [vmem:[%s171 + $0x17c] sm:%s163] %v362
          %v364 = vld [vmem:[%s170 + $0x180] sm:%s163]
          %365 = vst [vmem:[%s171 + $0x180] sm:%s163] %v364
          %v366 = vld [vmem:[%s170 + $0x188] sm:%s163]
          %367 = vst [vmem:[%s171 + $0x184] sm:%s163] %v366
          %v368 = vld [vmem:[%s170 + $0x184] sm:%s163]
          %369 = vst [vmem:[%s171 + $0x188] sm:%s163] %v368
          %v370 = vld [vmem:[%s170 + $0x18c] sm:%s163]
          %371 = vst [vmem:[%s171 + $0x18c] sm:%s163] %v370
          %v372 = vld [vmem:[%s170 + $0x190] sm:%s163]
          %373 = vst [vmem:[%s171 + $0x190] sm:%s163] %v372
          %v374 = vld [vmem:[%s170 + $0x198] sm:%s163]
          %375 = vst [vmem:[%s171 + $0x194] sm:%s163] %v374
          %v376 = vld [vmem:[%s170 + $0x194] sm:%s163]
          %377 = vst [vmem:[%s171 + $0x198] sm:%s163] %v376
          %v378 = vld [vmem:[%s170 + $0x19c] sm:%s163]
          %379 = vst [vmem:[%s171 + $0x19c] sm:%s163] %v378
          %v380 = vld [vmem:[%s170 + $0x1a0] sm:%s163]
          %381 = vst [vmem:[%s171 + $0x1a0] sm:%s163] %v380
          %v382 = vld [vmem:[%s170 + $0x1a8] sm:%s163]
          %383 = vst [vmem:[%s171 + $0x1a4] sm:%s163] %v382
          %v384 = vld [vmem:[%s170 + $0x1a4] sm:%s163]
          %385 = vst [vmem:[%s171 + $0x1a8] sm:%s163] %v384
          %v386 = vld [vmem:[%s170 + $0x1ac] sm:%s163]
          %387 = vst [vmem:[%s171 + $0x1ac] sm:%s163] %v386
          %v388 = vld [vmem:[%s170 + $0x1b0] sm:%s163]
          %389 = vst [vmem:[%s171 + $0x1b0] sm:%s163] %v388
          %v390 = vld [vmem:[%s170 + $0x1b8] sm:%s163]
          %391 = vst [vmem:[%s171 + $0x1b4] sm:%s163] %v390
          %v392 = vld [vmem:[%s170 + $0x1b4] sm:%s163]
          %393 = vst [vmem:[%s171 + $0x1b8] sm:%s163] %v392
          %v394 = vld [vmem:[%s170 + $0x1bc] sm:%s163]
          %395 = vst [vmem:[%s171 + $0x1bc] sm:%s163] %v394
          %v396 = vld [vmem:[%s170 + $0x1c0] sm:%s163]
          %397 = vst [vmem:[%s171 + $0x1c0] sm:%s163] %v396
          %v398 = vld [vmem:[%s170 + $0x1c8] sm:%s163]
          %399 = vst [vmem:[%s171 + $0x1c4] sm:%s163] %v398
          %v400 = vld [vmem:[%s170 + $0x1c4] sm:%s163]
          %401 = vst [vmem:[%s171 + $0x1c8] sm:%s163] %v400
          %v402 = vld [vmem:[%s170 + $0x1cc] sm:%s163]
          %403 = vst [vmem:[%s171 + $0x1cc] sm:%s163] %v402
          %v404 = vld [vmem:[%s170 + $0x1d0] sm:%s163]
          %405 = vst [vmem:[%s171 + $0x1d0] sm:%s163] %v404
          %v406 = vld [vmem:[%s170 + $0x1d8] sm:%s163]
          %407 = vst [vmem:[%s171 + $0x1d4] sm:%s163] %v406
          %v408 = vld [vmem:[%s170 + $0x1d4] sm:%s163]
          %409 = vst [vmem:[%s171 + $0x1d8] sm:%s163] %v408
          %v410 = vld [vmem:[%s170 + $0x1dc] sm:%s163]
          %411 = vst [vmem:[%s171 + $0x1dc] sm:%s163] %v410
        $region41: #{conv3d_3x3x3_pallas.1} parent=35 // loop_footer
          %s169 = sadd.s32 1, %s165
        $region42: #{conv3d_3x3x3_pallas.1} parent=35 // loop_footer_branch
          %164 = sbr.rel target = $region38
        $region43: #{conv3d_3x3x3_pallas.1} parent=35 // loop_exit
          _
      $region36: #{conv3d_3x3x3_pallas.1} parent=27 // pred_fallthru
        _
      // Predicated region
      $region62: #{conv3d_3x3x3_pallas.1} parent=27 // pred_check
        _
      $region63: #{conv3d_3x3x3_pallas.1} parent=27 // pred_check_branch
        %681 = sbr.rel (0) target = $region65
      $region64: #{conv3d_3x3x3_pallas.1} parent=27 // pred_region
        %682 = vsyncadd [#allocation3], 7680
      $region65: #{conv3d_3x3x3_pallas.1} parent=27 // pred_fallthru
        _
      %s683 = smul.u32 4, 10
      %s684 = smul.u32 %s683, 6
      %s685 = smul.u32 %s684, 2
      %s686 = sshll.u32 %s685, 4
      %687 = dma.done [#allocation3], %s686
      %v688 = vld [vmem:[%s1] sm:$0xf]
      %s689 = scalar_lea.vmem %s1, 4
      %v690 = vld [vmem:[%s689] sm:$0xf]
      %s691 = scalar_lea.vmem %s1, 8
      %v692 = vld [vmem:[%s691] sm:$0xf]
      %v693 = vld [vmem:[%s2] sm:$0xff]
      %v694 = vld [vmem:[#allocation2] sm:$0xff]
      %v695 = vld [vmem:[#allocation2 + $0x8] sm:$0xff]
      %v696 = vld [vmem:[#allocation2 + $0x10] sm:$0xff]
      %v697 = vld [vmem:[#allocation2 + $0x18] sm:$0xff]
      %v698 = vld [vmem:[#allocation2 + $0x20] sm:$0xff]
      %v699 = vld [vmem:[#allocation2 + $0x28] sm:$0xff]
      %s700 = scalar_lea.vmem [#allocation2], 48
      %v701 = vld [vmem:[%s700] sm:$0xff]
      %v702 = vld [vmem:[%s700 + $0x8] sm:$0xff]
      %v703 = vld [vmem:[%s700 + $0x10] sm:$0xff]
      %v704 = vld [vmem:[%s700 + $0x18] sm:$0xff]
      %v705 = vld [vmem:[%s700 + $0x20] sm:$0xff]
      %v706 = vld [vmem:[%s700 + $0x28] sm:$0xff]
      %vm707 = vcmask 392192
      %v709 = vsel %vm707, %v690, 0
      %711 = vmatprep.subr.bf16.mxu0 %v702
      %712 = vmatpush1.bf16.msra.mxu0 %v701
      %713 = vmatprep.subr.bf16.mxu0 %v704
      %714 = vmatpush1.bf16.msra.mxu0 %v703
      %715 = vmatprep.subr.bf16.mxu0 %v706
      %716 = vmatpush1.bf16.msra.mxu0 %v705
      %717 = vmatprep.subr.bf16.mxu0 0
      %718 = vmatpush1.bf16.msra.mxu0 0
      %719 = vmatprep.subr.bf16.mxu0 0
      %720 = vmatpush1.bf16.msra.mxu0 0
      %721 = vmatprep.subr.bf16.mxu0 0
      %722 = vmatpush1.bf16.msra.mxu0 0
      %723 = vmatprep.subr.bf16.mxu0 0
      %724 = vmatpush1.bf16.msra.mxu0 0
      %725 = vmatprep.subr.bf16.mxu0 0
      %726 = vmatpush1.bf16.msra.mxu0 0
      %727 = vmatprep.subr.bf16.mxu0 0
      %728 = vmatpush1.bf16.msra.mxu0 0
      %729 = vmatprep.subr.bf16.mxu0 0
      %730 = vmatpush1.bf16.msra.mxu0 0
      %731 = vmatprep.subr.bf16.mxu0 0
      %732 = vmatpush1.bf16.msra.mxu0 0
      %733 = vmatprep.subr.bf16.mxu0 0
      %734 = vmatpush1.bf16.msra.mxu0 0
      %735 = vmatprep.subr.bf16.mxu0 0
      %736 = vmatpush1.bf16.msra.mxu0 0
      %737 = vmatprep.subr.bf16.mxu0 0
      %738 = vmatpush1.bf16.msra.mxu0 0
      %739 = vmatprep.subr.bf16.mxu0 0
      %740 = vmatpush1.bf16.msra.mxu0 0
      %741 = vmatprep.subr.bf16.mxu0 0
      %742 = vmatpush1.bf16.msra.mxu0 0
      %743 = vmatprep.mubr.bf16.mxu0 0
      %744 = vmatmul.mubr.bf16.gmra.mrb[0].mxu0 %v709
      %v745 = vpop.f32.mrb[0].mxu0
      %v746 = vadd.f32 0.0, %v745
      %v747 = vpop.f32.mrb[0].mxu0
      %v748 = vadd.f32 0.0, %v747
      %v749 = vpop.f32.mrb[0].mxu0
      %v750 = vpop.f32.mrb[0].mxu0
      %751 = vdwg.mxu0
      %v753 = vsel %vm707, %v688, 0
      %755 = vmatprep.subr.bf16.mxu0 %v695
      %756 = vmatpush1.bf16.msra.mxu0 %v694
      %757 = vmatprep.subr.bf16.mxu0 %v697
      %758 = vmatpush1.bf16.msra.mxu0 %v696
      %759 = vmatprep.subr.bf16.mxu0 %v699
      %760 = vmatpush1.bf16.msra.mxu0 %v698
      %761 = vmatprep.subr.bf16.mxu0 0
      %762 = vmatpush1.bf16.msra.mxu0 0
      %763 = vmatprep.subr.bf16.mxu0 0
      %764 = vmatpush1.bf16.msra.mxu0 0
      %765 = vmatprep.subr.bf16.mxu0 0
      %766 = vmatpush1.bf16.msra.mxu0 0
      %767 = vmatprep.subr.bf16.mxu0 0
      %768 = vmatpush1.bf16.msra.mxu0 0
      %769 = vmatprep.subr.bf16.mxu0 0
      %770 = vmatpush1.bf16.msra.mxu0 0
      %771 = vmatprep.subr.bf16.mxu0 0
      %772 = vmatpush1.bf16.msra.mxu0 0
      %773 = vmatprep.subr.bf16.mxu0 0
      %774 = vmatpush1.bf16.msra.mxu0 0
      %775 = vmatprep.subr.bf16.mxu0 0
      %776 = vmatpush1.bf16.msra.mxu0 0
      %777 = vmatprep.subr.bf16.mxu0 0
      %778 = vmatpush1.bf16.msra.mxu0 0
      %779 = vmatprep.subr.bf16.mxu0 0
      %780 = vmatpush1.bf16.msra.mxu0 0
      %781 = vmatprep.subr.bf16.mxu0 0
      %782 = vmatpush1.bf16.msra.mxu0 0
      %783 = vmatprep.subr.bf16.mxu0 0
      %784 = vmatpush1.bf16.msra.mxu0 0
      %785 = vmatprep.subr.bf16.mxu0 0
      %786 = vmatpush1.bf16.msra.mxu0 0
      %787 = vmatprep.mubr.bf16.mxu0 0
      %788 = vmatmul.mubr.bf16.gmra.mrb[0].mxu0 %v753
      %v789 = vpop.f32.mrb[0].mxu0
      %v790 = vadd.f32 %v746, %v789
      %v791 = vpop.f32.mrb[0].mxu0
      %v792 = vadd.f32 %v748, %v791
      %v793 = vpop.f32.mrb[0].mxu0
      %v794 = vpop.f32.mrb[0].mxu0
      %795 = vdwg.mxu0
      %s796 = scalar_lea.vmem [#allocation2], 96
      %v797 = vld [vmem:[%s796] sm:$0xff]
      %v798 = vld [vmem:[%s796 + $0x8] sm:$0xff]
      %v799 = vld [vmem:[%s796 + $0x10] sm:$0xff]
      %v800 = vld [vmem:[%s796 + $0x18] sm:$0xff]
      %v801 = vld [vmem:[%s796 + $0x20] sm:$0xff]
      %v802 = vld [vmem:[%s796 + $0x28] sm:$0xff]
      %v804 = vsel %vm707, %v692, 0
      %806 = vmatprep.subr.bf16.mxu0 %v798
      %807 = vmatpush1.bf16.msra.mxu0 %v797
      %808 = vmatprep.subr.bf16.mxu0 %v800
      %809 = vmatpush1.bf16.msra.mxu0 %v799
      %810 = vmatprep.subr.bf16.mxu0 %v802
      %811 = vmatpush1.bf16.msra.mxu0 %v801
      %812 = vmatprep.subr.bf16.mxu0 0
      %813 = vmatpush1.bf16.msra.mxu0 0
      %814 = vmatprep.subr.bf16.mxu0 0
      %815 = vmatpush1.bf16.msra.mxu0 0
      %816 = vmatprep.subr.bf16.mxu0 0
      %817 = vmatpush1.bf16.msra.mxu0 0
      %818 = vmatprep.subr.bf16.mxu0 0
      %819 = vmatpush1.bf16.msra.mxu0 0
      %820 = vmatprep.subr.bf16.mxu0 0
      %821 = vmatpush1.bf16.msra.mxu0 0
      %822 = vmatprep.subr.bf16.mxu0 0
      %823 = vmatpush1.bf16.msra.mxu0 0
      %824 = vmatprep.subr.bf16.mxu0 0
      %825 = vmatpush1.bf16.msra.mxu0 0
      %826 = vmatprep.subr.bf16.mxu0 0
      %827 = vmatpush1.bf16.msra.mxu0 0
      %828 = vmatprep.subr.bf16.mxu0 0
      %829 = vmatpush1.bf16.msra.mxu0 0
      %830 = vmatprep.subr.bf16.mxu0 0
      %831 = vmatpush1.bf16.msra.mxu0 0
      %832 = vmatprep.subr.bf16.mxu0 0
      %833 = vmatpush1.bf16.msra.mxu0 0
      %834 = vmatprep.subr.bf16.mxu0 0
      %835 = vmatpush1.bf16.msra.mxu0 0
      %836 = vmatprep.subr.bf16.mxu0 0
      %837 = vmatpush1.bf16.msra.mxu0 0
      %838 = vmatprep.mubr.bf16.mxu0 0
      %839 = vmatmul.mubr.bf16.gmra.mrb[0].mxu0 %v804
      %v840 = vpop.f32.mrb[0].mxu0
      %v841 = vadd.f32 0.0, %v840
      %v842 = vpop.f32.mrb[0].mxu0
      %v843 = vadd.f32 0.0, %v842
      %v844 = vpop.f32.mrb[0].mxu0
      %v845 = vpop.f32.mrb[0].mxu0
      %846 = vdwg.mxu0
      %v847 = vadd.f32 %v790, %v841
      %v848 = vadd.f32 %v792, %v843
      %850 = vset.pattern.permute.xlu0 0
      %851 = vperm.xlu0 %850, %v693
      %v852 = vpop.permute.xlu0 %851
      %v854 = vadd.f32 %v847, %v852
      %v855 = vadd.f32 %v848, %v852
      %856 = vst [vmem:[%s146] sm:$0xff] %v854
      %857 = vst [vmem:[%s146 + $0x8] sm:$0xff] %v855
      %v858 = vld [vmem:[%s700] sm:$0xff]
      %v859 = vld [vmem:[%s700 + $0x8] sm:$0xff]
      %v860 = vld [vmem:[%s700 + $0x10] sm:$0xff]
      %v861 = vld [vmem:[%s700 + $0x18] sm:$0xff]
      %v862 = vld [vmem:[%s700 + $0x20] sm:$0xff]
      %v863 = vld [vmem:[%s700 + $0x28] sm:$0xff]
      %v864 = vld [vmem:[%s796] sm:$0xff]
      %v865 = vld [vmem:[%s796 + $0x8] sm:$0xff]
      %v866 = vld [vmem:[%s796 + $0x10] sm:$0xff]
      %v867 = vld [vmem:[%s796 + $0x18] sm:$0xff]
      %v868 = vld [vmem:[%s796 + $0x20] sm:$0xff]
      %v869 = vld [vmem:[%s796 + $0x28] sm:$0xff]
      %870 = vmatprep.subr.bf16.mxu0 %v865
      %871 = vmatpush1.bf16.msra.mxu0 %v864
      %872 = vmatprep.subr.bf16.mxu0 %v867
      %873 = vmatpush1.bf16.msra.mxu0 %v866
      %874 = vmatprep.subr.bf16.mxu0 %v869
      %875 = vmatpush1.bf16.msra.mxu0 %v868
      %876 = vmatprep.subr.bf16.mxu0 0
      %877 = vmatpush1.bf16.msra.mxu0 0
      %878 = vmatprep.subr.bf16.mxu0 0
      %879 = vmatpush1.bf16.msra.mxu0 0
      %880 = vmatprep.subr.bf16.mxu0 0
      %881 = vmatpush1.bf16.msra.mxu0 0
      %882 = vmatprep.subr.bf16.mxu0 0
      %883 = vmatpush1.bf16.msra.mxu0 0
      %884 = vmatprep.subr.bf16.mxu0 0
      %885 = vmatpush1.bf16.msra.mxu0 0
      %886 = vmatprep.subr.bf16.mxu0 0
      %887 = vmatpush1.bf16.msra.mxu0 0
      %888 = vmatprep.subr.bf16.mxu0 0
      %889 = vmatpush1.bf16.msra.mxu0 0
      %890 = vmatprep.subr.bf16.mxu0 0
      %891 = vmatpush1.bf16.msra.mxu0 0
      %892 = vmatprep.subr.bf16.mxu0 0
      %893 = vmatpush1.bf16.msra.mxu0 0
      %894 = vmatprep.subr.bf16.mxu0 0
      %895 = vmatpush1.bf16.msra.mxu0 0
      %896 = vmatprep.subr.bf16.mxu0 0
      %897 = vmatpush1.bf16.msra.mxu0 0
      %898 = vmatprep.subr.bf16.mxu0 0
      %899 = vmatpush1.bf16.msra.mxu0 0
      %900 = vmatprep.subr.bf16.mxu0 0
      %901 = vmatpush1.bf16.msra.mxu0 0
      %902 = vmatprep.mubr.bf16.mxu0 0
      %903 = vmatmul.mubr.bf16.gmra.mrb[0].mxu0 %v709
      %v904 = vpop.f32.mrb[0].mxu0
      %v905 = vadd.f32 0.0, %v904
      %v906 = vpop.f32.mrb[0].mxu0
      %v907 = vadd.f32 0.0, %v906
      %v908 = vpop.f32.mrb[0].mxu0
      %v909 = vpop.f32.mrb[0].mxu0
      %910 = vdwg.mxu0
      %911 = vmatprep.subr.bf16.mxu0 %v859
      %912 = vmatpush1.bf16.msra.mxu0 %v858
      %913 = vmatprep.subr.bf16.mxu0 %v861
      %914 = vmatpush1.bf16.msra.mxu0 %v860
      %915 = vmatprep.subr.bf16.mxu0 %v863
      %916 = vmatpush1.bf16.msra.mxu0 %v862
      %917 = vmatprep.subr.bf16.mxu0 0
      %918 = vmatpush1.bf16.msra.mxu0 0
      %919 = vmatprep.subr.bf16.mxu0 0
      %920 = vmatpush1.bf16.msra.mxu0 0
      %921 = vmatprep.subr.bf16.mxu0 0
      %922 = vmatpush1.bf16.msra.mxu0 0
      %923 = vmatprep.subr.bf16.mxu0 0
      %924 = vmatpush1.bf16.msra.mxu0 0
      %925 = vmatprep.subr.bf16.mxu0 0
      %926 = vmatpush1.bf16.msra.mxu0 0
      %927 = vmatprep.subr.bf16.mxu0 0
      %928 = vmatpush1.bf16.msra.mxu0 0
      %929 = vmatprep.subr.bf16.mxu0 0
      %930 = vmatpush1.bf16.msra.mxu0 0
      %931 = vmatprep.subr.bf16.mxu0 0
      %932 = vmatpush1.bf16.msra.mxu0 0
      %933 = vmatprep.subr.bf16.mxu0 0
      %934 = vmatpush1.bf16.msra.mxu0 0
      %935 = vmatprep.subr.bf16.mxu0 0
      %936 = vmatpush1.bf16.msra.mxu0 0
      %937 = vmatprep.subr.bf16.mxu0 0
      %938 = vmatpush1.bf16.msra.mxu0 0
      %939 = vmatprep.subr.bf16.mxu0 0
      %940 = vmatpush1.bf16.msra.mxu0 0
      %941 = vmatprep.subr.bf16.mxu0 0
      %942 = vmatpush1.bf16.msra.mxu0 0
      %943 = vmatprep.mubr.bf16.mxu0 0
      %944 = vmatmul.mubr.bf16.gmra.mrb[0].mxu0 %v753
      %v945 = vpop.f32.mrb[0].mxu0
      %v946 = vadd.f32 %v905, %v945
      %v947 = vpop.f32.mrb[0].mxu0
      %v948 = vadd.f32 %v907, %v947
      %v949 = vpop.f32.mrb[0].mxu0
      %v950 = vpop.f32.mrb[0].mxu0
      %951 = vdwg.mxu0
      %s952 = scalar_lea.vmem [#allocation2], 144
      %v953 = vld [vmem:[%s952] sm:$0xff]
      %v954 = vld [vmem:[%s952 + $0x8] sm:$0xff]
      %v955 = vld [vmem:[%s952 + $0x10] sm:$0xff]
      %v956 = vld [vmem:[%s952 + $0x18] sm:$0xff]
      %v957 = vld [vmem:[%s952 + $0x20] sm:$0xff]
      %v958 = vld [vmem:[%s952 + $0x28] sm:$0xff]
      %959 = vmatprep.subr.bf16.mxu0 %v954
      %960 = vmatpush1.bf16.msra.mxu0 %v953
      %961 = vmatprep.subr.bf16.mxu0 %v956
      %962 = vmatpush1.bf16.msra.mxu0 %v955
      %963 = vmatprep.subr.bf16.mxu0 %v958
      %964 = vmatpush1.bf16.msra.mxu0 %v957
      %965 = vmatprep.subr.bf16.mxu0 0
      %966 = vmatpush1.bf16.msra.mxu0 0
      %967 = vmatprep.subr.bf16.mxu0 0
      %968 = vmatpush1.bf16.msra.mxu0 0
      %969 = vmatprep.subr.bf16.mxu0 0
      %970 = vmatpush1.bf16.msra.mxu0 0
      %971 = vmatprep.subr.bf16.mxu0 0
      %972 = vmatpush1.bf16.msra.mxu0 0
      %973 = vmatprep.subr.bf16.mxu0 0
      %974 = vmatpush1.bf16.msra.mxu0 0
      %975 = vmatprep.subr.bf16.mxu0 0
      %976 = vmatpush1.bf16.msra.mxu0 0
      %977 = vmatprep.subr.bf16.mxu0 0
      %978 = vmatpush1.bf16.msra.mxu0 0
      %979 = vmatprep.subr.bf16.mxu0 0
      %980 = vmatpush1.bf16.msra.mxu0 0
      %981 = vmatprep.subr.bf16.mxu0 0
      %982 = vmatpush1.bf16.msra.mxu0 0
      %983 = vmatprep.subr.bf16.mxu0 0
      %984 = vmatpush1.bf16.msra.mxu0 0
      %985 = vmatprep.subr.bf16.mxu0 0
      %986 = vmatpush1.bf16.msra.mxu0 0
      %987 = vmatprep.subr.bf16.mxu0 0
      %988 = vmatpush1.bf16.msra.mxu0 0
      %989 = vmatprep.subr.bf16.mxu0 0
      %990 = vmatpush1.bf16.msra.mxu0 0
      %991 = vmatprep.mubr.bf16.mxu0 0
      %992 = vmatmul.mubr.bf16.gmra.mrb[0].mxu0 %v804
      %v993 = vpop.f32.mrb[0].mxu0
      %v994 = vadd.f32 0.0, %v993
      %v995 = vpop.f32.mrb[0].mxu0
      %v996 = vadd.f32 0.0, %v995
      %v997 = vpop.f32.mrb[0].mxu0
      %v998 = vpop.f32.mrb[0].mxu0
      %999 = vdwg.mxu0
      %v1000 = vadd.f32 %v946, %v994
      %v1001 = vadd.f32 %v948, %v996
      %v1002 = vadd.f32 %v1000, %v852
      %v1003 = vadd.f32 %v1001, %v852
      %1004 = vst [vmem:[%s146 + $0x10] sm:$0xff] %v1002
      %1005 = vst [vmem:[%s146 + $0x18] sm:$0xff] %v1003
      %v1006 = vld [vmem:[%s796] sm:$0xff]
      %v1007 = vld [vmem:[%s796 + $0x8] sm:$0xff]
      %v1008 = vld [vmem:[%s796 + $0x10] sm:$0xff]
      %v1009 = vld [vmem:[%s796 + $0x18] sm:$0xff]
      %v1010 = vld [vmem:[%s796 + $0x20] sm:$0xff]
      %v1011 = vld [vmem:[%s796 + $0x28] sm:$0xff]
      %v1012 = vld [vmem:[%s952] sm:$0xff]
      %v1013 = vld [vmem:[%s952 + $0x8] sm:$0xff]
      %v1014 = vld [vmem:[%s952 + $0x10] sm:$0xff]
      %v1015 = vld [vmem:[%s952 + $0x18] sm:$0xff]
      %v1016 = vld [vmem:[%s952 + $0x20] sm:$0xff]
      %v1017 = vld [vmem:[%s952 + $0x28] sm:$0xff]
      %1018 = vmatprep.subr.bf16.mxu0 %v1013
      %1019 = vmatpush1.bf16.msra.mxu0 %v1012
      %1020 = vmatprep.subr.bf16.mxu0 %v1015
      %1021 = vmatpush1.bf16.msra.mxu0 %v1014
      %1022 = vmatprep.subr.bf16.mxu0 %v1017
      %1023 = vmatpush1.bf16.msra.mxu0 %v1016
      %1024 = vmatprep.subr.bf16.mxu0 0
      %1025 = vmatpush1.bf16.msra.mxu0 0
      %1026 = vmatprep.subr.bf16.mxu0 0
      %1027 = vmatpush1.bf16.msra.mxu0 0
      %1028 = vmatprep.subr.bf16.mxu0 0
      %1029 = vmatpush1.bf16.msra.mxu0 0
      %1030 = vmatprep.subr.bf16.mxu0 0
      %1031 = vmatpush1.bf16.msra.mxu0 0
      %1032 = vmatprep.subr.bf16.mxu0 0
      %1033 = vmatpush1.bf16.msra.mxu0 0
      %1034 = vmatprep.subr.bf16.mxu0 0
      %1035 = vmatpush1.bf16.msra.mxu0 0
      %1036 = vmatprep.subr.bf16.mxu0 0
      %1037 = vmatpush1.bf16.msra.mxu0 0
      %1038 = vmatprep.subr.bf16.mxu0 0
      %1039 = vmatpush1.bf16.msra.mxu0 0
      %1040 = vmatprep.subr.bf16.mxu0 0
      %1041 = vmatpush1.bf16.msra.mxu0 0
      %1042 = vmatprep.subr.bf16.mxu0 0
      %1043 = vmatpush1.bf16.msra.mxu0 0
      %1044 = vmatprep.subr.bf16.mxu0 0
      %1045 = vmatpush1.bf16.msra.mxu0 0
      %1046 = vmatprep.subr.bf16.mxu0 0
      %1047 = vmatpush1.bf16.msra.mxu0 0
      %1048 = vmatprep.subr.bf16.mxu0 0
      %1049 = vmatpush1.bf16.msra.mxu0 0
      %1050 = vmatprep.mubr.bf16.mxu0 0
      %1051 = vmatmul.mubr.bf16.gmra.mrb[0].mxu0 %v709
      %v1052 = vpop.f32.mrb[0].mxu0
      %v1053 = vadd.f32 0.0, %v1052
      %v1054 = vpop.f32.mrb[0].mxu0
      %v1055 = vadd.f32 0.0, %v1054
      %v1056 = vpop.f32.mrb[0].mxu0
      %v1057 = vpop.f32.mrb[0].mxu0
      %1058 = vdwg.mxu0
      %1059 = vmatprep.subr.bf16.mxu0 %v1007
      %1060 = vmatpush1.bf16.msra.mxu0 %v1006
      %1061 = vmatprep.subr.bf16.mxu0 %v1009
      %1062 = vmatpush1.bf16.msra.mxu0 %v1008
      %1063 = vmatprep.subr.bf16.mxu0 %v1011
      %1064 = vmatpush1.bf16.msra.mxu0 %v1010
      %1065 = vmatprep.subr.bf16.mxu0 0
      %1066 = vmatpush1.bf16.msra.mxu0 0
      %1067 = vmatprep.subr.bf16.mxu0 0
      %1068 = vmatpush1.bf16.msra.mxu0 0
      %1069 = vmatprep.subr.bf16.mxu0 0
      %1070 = vmatpush1.bf16.msra.mxu0 0
      %1071 = vmatprep.subr.bf16.mxu0 0
      %1072 = vmatpush1.bf16.msra.mxu0 0
      %1073 = vmatprep.subr.bf16.mxu0 0
      %1074 = vmatpush1.bf16.msra.mxu0 0
      %1075 = vmatprep.subr.bf16.mxu0 0
      %1076 = vmatpush1.bf16.msra.mxu0 0
      %1077 = vmatprep.subr.bf16.mxu0 0
      %1078 = vmatpush1.bf16.msra.mxu0 0
      %1079 = vmatprep.subr.bf16.mxu0 0
      %1080 = vmatpush1.bf16.msra.mxu0 0
      %1081 = vmatprep.subr.bf16.mxu0 0
      %1082 = vmatpush1.bf16.msra.mxu0 0
      %1083 = vmatprep.subr.bf16.mxu0 0
      %1084 = vmatpush1.bf16.msra.mxu0 0
      %1085 = vmatprep.subr.bf16.mxu0 0
      %1086 = vmatpush1.bf16.msra.mxu0 0
      %1087 = vmatprep.subr.bf16.mxu0 0
      %1088 = vmatpush1.bf16.msra.mxu0 0
      %1089 = vmatprep.subr.bf16.mxu0 0
      %1090 = vmatpush1.bf16.msra.mxu0 0
      %1091 = vmatprep.mubr.bf16.mxu0 0
      %1092 = vmatmul.mubr.bf16.gmra.mrb[0].mxu0 %v753
      %v1093 = vpop.f32.mrb[0].mxu0
      %v1094 = vadd.f32 %v1053, %v1093
      %v1095 = vpop.f32.mrb[0].mxu0
      %v1096 = vadd.f32 %v1055, %v1095
      %v1097 = vpop.f32.mrb[0].mxu0
      %v1098 = vpop.f32.mrb[0].mxu0
      %1099 = vdwg.mxu0
      %s1100 = scalar_lea.vmem [#allocation2], 192
      %v1101 = vld [vmem:[%s1100] sm:$0xff]
      %v1102 = vld [vmem:[%s1100 + $0x8] sm:$0xff]
      %v1103 = vld [vmem:[%s1100 + $0x10] sm:$0xff]
      %v1104 = vld [vmem:[%s1100 + $0x18] sm:$0xff]
      %v1105 = vld [vmem:[%s1100 + $0x20] sm:$0xff]
      %v1106 = vld [vmem:[%s1100 + $0x28] sm:$0xff]
      %1107 = vmatprep.subr.bf16.mxu0 %v1102
      %1108 = vmatpush1.bf16.msra.mxu0 %v1101
      %1109 = vmatprep.subr.bf16.mxu0 %v1104
      %1110 = vmatpush1.bf16.msra.mxu0 %v1103
      %1111 = vmatprep.subr.bf16.mxu0 %v1106
      %1112 = vmatpush1.bf16.msra.mxu0 %v1105
      %1113 = vmatprep.subr.bf16.mxu0 0
      %1114 = vmatpush1.bf16.msra.mxu0 0
      %1115 = vmatprep.subr.bf16.mxu0 0
      %1116 = vmatpush1.bf16.msra.mxu0 0
      %1117 = vmatprep.subr.bf16.mxu0 0
      %1118 = vmatpush1.bf16.msra.mxu0 0
      %1119 = vmatprep.subr.bf16.mxu0 0
      %1120 = vmatpush1.bf16.msra.mxu0 0
      %1121 = vmatprep.subr.bf16.mxu0 0
      %1122 = vmatpush1.bf16.msra.mxu0 0
      %1123 = vmatprep.subr.bf16.mxu0 0
      %1124 = vmatpush1.bf16.msra.mxu0 0
      %1125 = vmatprep.subr.bf16.mxu0 0
      %1126 = vmatpush1.bf16.msra.mxu0 0
      %1127 = vmatprep.subr.bf16.mxu0 0
      %1128 = vmatpush1.bf16.msra.mxu0 0
      %1129 = vmatprep.subr.bf16.mxu0 0
      %1130 = vmatpush1.bf16.msra.mxu0 0
      %1131 = vmatprep.subr.bf16.mxu0 0
      %1132 = vmatpush1.bf16.msra.mxu0 0
      %1133 = vmatprep.subr.bf16.mxu0 0
      %1134 = vmatpush1.bf16.msra.mxu0 0
      %1135 = vmatprep.subr.bf16.mxu0 0
      %1136 = vmatpush1.bf16.msra.mxu0 0
      %1137 = vmatprep.subr.bf16.mxu0 0
      %1138 = vmatpush1.bf16.msra.mxu0 0
      %1139 = vmatprep.mubr.bf16.mxu0 0
      %1140 = vmatmul.mubr.bf16.gmra.mrb[0].mxu0 %v804
      %v1141 = vpop.f32.mrb[0].mxu0
      %v1142 = vadd.f32 0.0, %v1141
      %v1143 = vpop.f32.mrb[0].mxu0
      %v1144 = vadd.f32 0.0, %v1143
      %v1145 = vpop.f32.mrb[0].mxu0
      %v1146 = vpop.f32.mrb[0].mxu0
      %1147 = vdwg.mxu0
      %v1148 = vadd.f32 %v1094, %v1142
      %v1149 = vadd.f32 %v1096, %v1144
      %v1150 = vadd.f32 %v1148, %v852
      %v1151 = vadd.f32 %v1149, %v852
      %1152 = vst [vmem:[%s146 + $0x20] sm:$0xff] %v1150
      %1153 = vst [vmem:[%s146 + $0x28] sm:$0xff] %v1151
      %v1154 = vld [vmem:[%s952] sm:$0xff]
      %v1155 = vld [vmem:[%s952 + $0x8] sm:$0xff]
      %v1156 = vld [vmem:[%s952 + $0x10] sm:$0xff]
      %v1157 = vld [vmem:[%s952 + $0x18] sm:$0xff]
      %v1158 = vld [vmem:[%s952 + $0x20] sm:$0xff]
      %v1159 = vld [vmem:[%s952 + $0x28] sm:$0xff]
      %v1160 = vld [vmem:[%s1100] sm:$0xff]
      %v1161 = vld [vmem:[%s1100 + $0x8] sm:$0xff]
      %v1162 = vld [vmem:[%s1100 + $0x10] sm:$0xff]
      %v1163 = vld [vmem:[%s1100 + $0x18] sm:$0xff]
      %v1164 = vld [vmem:[%s1100 + $0x20] sm:$0xff]
      %v1165 = vld [vmem:[%s1100 + $0x28] sm:$0xff]
      %1166 = vmatprep.subr.bf16.mxu0 %v1161
      %1167 = vmatpush1.bf16.msra.mxu0 %v1160
      %1168 = vmatprep.subr.bf16.mxu0 %v1163
      %1169 = vmatpush1.bf16.msra.mxu0 %v1162
      %1170 = vmatprep.subr.bf16.mxu0 %v1165
      %1171 = vmatpush1.bf16.msra.mxu0 %v1164
      %1172 = vmatprep.subr.bf16.mxu0 0
      %1173 = vmatpush1.bf16.msra.mxu0 0
      %1174 = vmatprep.subr.bf16.mxu0 0
      %1175 = vmatpush1.bf16.msra.mxu0 0
      %1176 = vmatprep.subr.bf16.mxu0 0
      %1177 = vmatpush1.bf16.msra.mxu0 0
      %1178 = vmatprep.subr.bf16.mxu0 0
      %1179 = vmatpush1.bf16.msra.mxu0 0
      %1180 = vmatprep.subr.bf16.mxu0 0
      %1181 = vmatpush1.bf16.msra.mxu0 0
      %1182 = vmatprep.subr.bf16.mxu0 0
      %1183 = vmatpush1.bf16.msra.mxu0 0
      %1184 = vmatprep.subr.bf16.mxu0 0
      %1185 = vmatpush1.bf16.msra.mxu0 0
      %1186 = vmatprep.subr.bf16.mxu0 0
      %1187 = vmatpush1.bf16.msra.mxu0 0
      %1188 = vmatprep.subr.bf16.mxu0 0
      %1189 = vmatpush1.bf16.msra.mxu0 0
      %1190 = vmatprep.subr.bf16.mxu0 0
      %1191 = vmatpush1.bf16.msra.mxu0 0
      %1192 = vmatprep.subr.bf16.mxu0 0
      %1193 = vmatpush1.bf16.msra.mxu0 0
      %1194 = vmatprep.subr.bf16.mxu0 0
      %1195 = vmatpush1.bf16.msra.mxu0 0
      %1196 = vmatprep.subr.bf16.mxu0 0
      %1197 = vmatpush1.bf16.msra.mxu0 0
      %1198 = vmatprep.mubr.bf16.mxu0 0
      %1199 = vmatmul.mubr.bf16.gmra.mrb[0].mxu0 %v709
      %v1200 = vpop.f32.mrb[0].mxu0
      %v1201 = vadd.f32 0.0, %v1200
      %v1202 = vpop.f32.mrb[0].mxu0
      %v1203 = vadd.f32 0.0, %v1202
      %v1204 = vpop.f32.mrb[0].mxu0
      %v1205 = vpop.f32.mrb[0].mxu0
      %1206 = vdwg.mxu0
      %1207 = vmatprep.subr.bf16.mxu0 %v1155
      %1208 = vmatpush1.bf16.msra.mxu0 %v1154
      %1209 = vmatprep.subr.bf16.mxu0 %v1157
      %1210 = vmatpush1.bf16.msra.mxu0 %v1156
      %1211 = vmatprep.subr.bf16.mxu0 %v1159
      %1212 = vmatpush1.bf16.msra.mxu0 %v1158
      %1213 = vmatprep.subr.bf16.mxu0 0
      %1214 = vmatpush1.bf16.msra.mxu0 0
      %1215 = vmatprep.subr.bf16.mxu0 0
      %1216 = vmatpush1.bf16.msra.mxu0 0
      %1217 = vmatprep.subr.bf16.mxu0 0
      %1218 = vmatpush1.bf16.msra.mxu0 0
      %1219 = vmatprep.subr.bf16.mxu0 0
      %1220 = vmatpush1.bf16.msra.mxu0 0
      %1221 = vmatprep.subr.bf16.mxu0 0
      %1222 = vmatpush1.bf16.msra.mxu0 0
      %1223 = vmatprep.subr.bf16.mxu0 0
      %1224 = vmatpush1.bf16.msra.mxu0 0
      %1225 = vmatprep.subr.bf16.mxu0 0
      %1226 = vmatpush1.bf16.msra.mxu0 0
      %1227 = vmatprep.subr.bf16.mxu0 0
      %1228 = vmatpush1.bf16.msra.mxu0 0
      %1229 = vmatprep.subr.bf16.mxu0 0
      %1230 = vmatpush1.bf16.msra.mxu0 0
      %1231 = vmatprep.subr.bf16.mxu0 0
      %1232 = vmatpush1.bf16.msra.mxu0 0
      %1233 = vmatprep.subr.bf16.mxu0 0
      %1234 = vmatpush1.bf16.msra.mxu0 0
      %1235 = vmatprep.subr.bf16.mxu0 0
      %1236 = vmatpush1.bf16.msra.mxu0 0
      %1237 = vmatprep.subr.bf16.mxu0 0
      %1238 = vmatpush1.bf16.msra.mxu0 0
      %1239 = vmatprep.mubr.bf16.mxu0 0
      %1240 = vmatmul.mubr.bf16.gmra.mrb[0].mxu0 %v753
      %v1241 = vpop.f32.mrb[0].mxu0
      %v1242 = vadd.f32 %v1201, %v1241
      %v1243 = vpop.f32.mrb[0].mxu0
      %v1244 = vadd.f32 %v1203, %v1243
      %v1245 = vpop.f32.mrb[0].mxu0
      %v1246 = vpop.f32.mrb[0].mxu0
      %1247 = vdwg.mxu0
      %s1248 = scalar_lea.vmem [#allocation2], 240
      %v1249 = vld [vmem:[%s1248] sm:$0xff]
      %v1250 = vld [vmem:[%s1248 + $0x8] sm:$0xff]
      %v1251 = vld [vmem:[%s1248 + $0x10] sm:$0xff]
      %v1252 = vld [vmem:[%s1248 + $0x18] sm:$0xff]
      %v1253 = vld [vmem:[%s1248 + $0x20] sm:$0xff]
      %v1254 = vld [vmem:[%s1248 + $0x28] sm:$0xff]
      %1255 = vmatprep.subr.bf16.mxu0 %v1250
      %1256 = vmatpush1.bf16.msra.mxu0 %v1249
      %1257 = vmatprep.subr.bf16.mxu0 %v1252
      %1258 = vmatpush1.bf16.msra.mxu0 %v1251
      %1259 = vmatprep.subr.bf16.mxu0 %v1254
      %1260 = vmatpush1.bf16.msra.mxu0 %v1253
      %1261 = vmatprep.subr.bf16.mxu0 0
      %1262 = vmatpush1.bf16.msra.mxu0 0
      %1263 = vmatprep.subr.bf16.mxu0 0
      %1264 = vmatpush1.bf16.msra.mxu0 0
      %1265 = vmatprep.subr.bf16.mxu0 0
      %1266 = vmatpush1.bf16.msra.mxu0 0
      %1267 = vmatprep.subr.bf16.mxu0 0
      %1268 = vmatpush1.bf16.msra.mxu0 0
      %1269 = vmatprep.subr.bf16.mxu0 0
      %1270 = vmatpush1.bf16.msra.mxu0 0
      %1271 = vmatprep.subr.bf16.mxu0 0
      %1272 = vmatpush1.bf16.msra.mxu0 0
      %1273 = vmatprep.subr.bf16.mxu0 0
      %1274 = vmatpush1.bf16.msra.mxu0 0
      %1275 = vmatprep.subr.bf16.mxu0 0
      %1276 = vmatpush1.bf16.msra.mxu0 0
      %1277 = vmatprep.subr.bf16.mxu0 0
      %1278 = vmatpush1.bf16.msra.mxu0 0
      %1279 = vmatprep.subr.bf16.mxu0 0
      %1280 = vmatpush1.bf16.msra.mxu0 0
      %1281 = vmatprep.subr.bf16.mxu0 0
      %1282 = vmatpush1.bf16.msra.mxu0 0
      %1283 = vmatprep.subr.bf16.mxu0 0
      %1284 = vmatpush1.bf16.msra.mxu0 0
      %1285 = vmatprep.subr.bf16.mxu0 0
      %1286 = vmatpush1.bf16.msra.mxu0 0
      %1287 = vmatprep.mubr.bf16.mxu0 0
      %1288 = vmatmul.mubr.bf16.gmra.mrb[0].mxu0 %v804
      %v1289 = vpop.f32.mrb[0].mxu0
      %v1290 = vadd.f32 0.0, %v1289
      %v1291 = vpop.f32.mrb[0].mxu0
      %v1292 = vadd.f32 0.0, %v1291
      %v1293 = vpop.f32.mrb[0].mxu0
      %v1294 = vpop.f32.mrb[0].mxu0
      %1295 = vdwg.mxu0
      %v1296 = vadd.f32 %v1242, %v1290
      %v1297 = vadd.f32 %v1244, %v1292
      %v1298 = vadd.f32 %v1296, %v852
      %v1299 = vadd.f32 %v1297, %v852
      %1300 = vst [vmem:[%s146 + $0x30] sm:$0xff] %v1298
      %1301 = vst [vmem:[%s146 + $0x38] sm:$0xff] %v1299
      %v1302 = vld [vmem:[%s1100] sm:$0xff]
      %v1303 = vld [vmem:[%s1100 + $0x8] sm:$0xff]
      %v1304 = vld [vmem:[%s1100 + $0x10] sm:$0xff]
      %v1305 = vld [vmem:[%s1100 + $0x18] sm:$0xff]
      %v1306 = vld [vmem:[%s1100 + $0x20] sm:$0xff]
      %v1307 = vld [vmem:[%s1100 + $0x28] sm:$0xff]
      %v1308 = vld [vmem:[%s1248] sm:$0xff]
      %v1309 = vld [vmem:[%s1248 + $0x8] sm:$0xff]
      %v1310 = vld [vmem:[%s1248 + $0x10] sm:$0xff]
      %v1311 = vld [vmem:[%s1248 + $0x18] sm:$0xff]
      %v1312 = vld [vmem:[%s1248 + $0x20] sm:$0xff]
      %v1313 = vld [vmem:[%s1248 + $0x28] sm:$0xff]
      %1314 = vmatprep.subr.bf16.mxu0 %v1309
      %1315 = vmatpush1.bf16.msra.mxu0 %v1308
      %1316 = vmatprep.subr.bf16.mxu0 %v1311
      %1317 = vmatpush1.bf16.msra.mxu0 %v1310
      %1318 = vmatprep.subr.bf16.mxu0 %v1313
      %1319 = vmatpush1.bf16.msra.mxu0 %v1312
      %1320 = vmatprep.subr.bf16.mxu0 0
      %1321 = vmatpush1.bf16.msra.mxu0 0
      %1322 = vmatprep.subr.bf16.mxu0 0
      %1323 = vmatpush1.bf16.msra.mxu0 0
      %1324 = vmatprep.subr.bf16.mxu0 0
      %1325 = vmatpush1.bf16.msra.mxu0 0
      %1326 = vmatprep.subr.bf16.mxu0 0
      %1327 = vmatpush1.bf16.msra.mxu0 0
      %1328 = vmatprep.subr.bf16.mxu0 0
      %1329 = vmatpush1.bf16.msra.mxu0 0
      %1330 = vmatprep.subr.bf16.mxu0 0
      %1331 = vmatpush1.bf16.msra.mxu0 0
      %1332 = vmatprep.subr.bf16.mxu0 0
      %1333 = vmatpush1.bf16.msra.mxu0 0
      %1334 = vmatprep.subr.bf16.mxu0 0
      %1335 = vmatpush1.bf16.msra.mxu0 0
      %1336 = vmatprep.subr.bf16.mxu0 0
      %1337 = vmatpush1.bf16.msra.mxu0 0
      %1338 = vmatprep.subr.bf16.mxu0 0
      %1339 = vmatpush1.bf16.msra.mxu0 0
      %1340 = vmatprep.subr.bf16.mxu0 0
      %1341 = vmatpush1.bf16.msra.mxu0 0
      %1342 = vmatprep.subr.bf16.mxu0 0
      %1343 = vmatpush1.bf16.msra.mxu0 0
      %1344 = vmatprep.subr.bf16.mxu0 0
      %1345 = vmatpush1.bf16.msra.mxu0 0
      %1346 = vmatprep.mubr.bf16.mxu0 0
      %1347 = vmatmul.mubr.bf16.gmra.mrb[0].mxu0 %v709
      %v1348 = vpop.f32.mrb[0].mxu0
      %v1349 = vadd.f32 0.0, %v1348
      %v1350 = vpop.f32.mrb[0].mxu0
      %v1351 = vadd.f32 0.0, %v1350
      %v1352 = vpop.f32.mrb[0].mxu0
      %v1353 = vpop.f32.mrb[0].mxu0
      %1354 = vdwg.mxu0
      %1355 = vmatprep.subr.bf16.mxu0 %v1303
      %1356 = vmatpush1.bf16.msra.mxu0 %v1302
      %1357 = vmatprep.subr.bf16.mxu0 %v1305
      %1358 = vmatpush1.bf16.msra.mxu0 %v1304
      %1359 = vmatprep.subr.bf16.mxu0 %v1307
      %1360 = vmatpush1.bf16.msra.mxu0 %v1306
      %1361 = vmatprep.subr.bf16.mxu0 0
      %1362 = vmatpush1.bf16.msra.mxu0 0
      %1363 = vmatprep.subr.bf16.mxu0 0
      %1364 = vmatpush1.bf16.msra.mxu0 0
      %1365 = vmatprep.subr.bf16.mxu0 0
      %1366 = vmatpush1.bf16.msra.mxu0 0
      %1367 = vmatprep.subr.bf16.mxu0 0
      %1368 = vmatpush1.bf16.msra.mxu0 0
      %1369 = vmatprep.subr.bf16.mxu0 0
      %1370 = vmatpush1.bf16.msra.mxu0 0
      %1371 = vmatprep.subr.bf16.mxu0 0
      %1372 = vmatpush1.bf16.msra.mxu0 0
      %1373 = vmatprep.subr.bf16.mxu0 0
      %1374 = vmatpush1.bf16.msra.mxu0 0
      %1375 = vmatprep.subr.bf16.mxu0 0
      %1376 = vmatpush1.bf16.msra.mxu0 0
      %1377 = vmatprep.subr.bf16.mxu0 0
      %1378 = vmatpush1.bf16.msra.mxu0 0
      %1379 = vmatprep.subr.bf16.mxu0 0
      %1380 = vmatpush1.bf16.msra.mxu0 0
      %1381 = vmatprep.subr.bf16.mxu0 0
      %1382 = vmatpush1.bf16.msra.mxu0 0
      %1383 = vmatprep.subr.bf16.mxu0 0
      %1384 = vmatpush1.bf16.msra.mxu0 0
      %1385 = vmatprep.subr.bf16.mxu0 0
      %1386 = vmatpush1.bf16.msra.mxu0 0
      %1387 = vmatprep.mubr.bf16.mxu0 0
      %1388 = vmatmul.mubr.bf16.gmra.mrb[0].mxu0 %v753
      %v1389 = vpop.f32.mrb[0].mxu0
      %v1390 = vadd.f32 %v1349, %v1389
      %v1391 = vpop.f32.mrb[0].mxu0
      %v1392 = vadd.f32 %v1351, %v1391
      %v1393 = vpop.f32.mrb[0].mxu0
      %v1394 = vpop.f32.mrb[0].mxu0
      %1395 = vdwg.mxu0
      %s1396 = scalar_lea.vmem [#allocation2], 288
      %v1397 = vld [vmem:[%s1396] sm:$0xff]
      %v1398 = vld [vmem:[%s1396 + $0x8] sm:$0xff]
      %v1399 = vld [vmem:[%s1396 + $0x10] sm:$0xff]
      %v1400 = vld [vmem:[%s1396 + $0x18] sm:$0xff]
      %v1401 = vld [vmem:[%s1396 + $0x20] sm:$0xff]
      %v1402 = vld [vmem:[%s1396 + $0x28] sm:$0xff]
      %1403 = vmatprep.subr.bf16.mxu0 %v1398
      %1404 = vmatpush1.bf16.msra.mxu0 %v1397
      %1405 = vmatprep.subr.bf16.mxu0 %v1400
      %1406 = vmatpush1.bf16.msra.mxu0 %v1399
      %1407 = vmatprep.subr.bf16.mxu0 %v1402
      %1408 = vmatpush1.bf16.msra.mxu0 %v1401
      %1409 = vmatprep.subr.bf16.mxu0 0
      %1410 = vmatpush1.bf16.msra.mxu0 0
      %1411 = vmatprep.subr.bf16.mxu0 0
      %1412 = vmatpush1.bf16.msra.mxu0 0
      %1413 = vmatprep.subr.bf16.mxu0 0
      %1414 = vmatpush1.bf16.msra.mxu0 0
      %1415 = vmatprep.subr.bf16.mxu0 0
      %1416 = vmatpush1.bf16.msra.mxu0 0
      %1417 = vmatprep.subr.bf16.mxu0 0
      %1418 = vmatpush1.bf16.msra.mxu0 0
      %1419 = vmatprep.subr.bf16.mxu0 0
      %1420 = vmatpush1.bf16.msra.mxu0 0
      %1421 = vmatprep.subr.bf16.mxu0 0
      %1422 = vmatpush1.bf16.msra.mxu0 0
      %1423 = vmatprep.subr.bf16.mxu0 0
      %1424 = vmatpush1.bf16.msra.mxu0 0
      %1425 = vmatprep.subr.bf16.mxu0 0
      %1426 = vmatpush1.bf16.msra.mxu0 0
      %1427 = vmatprep.subr.bf16.mxu0 0
      %1428 = vmatpush1.bf16.msra.mxu0 0
      %1429 = vmatprep.subr.bf16.mxu0 0
      %1430 = vmatpush1.bf16.msra.mxu0 0
      %1431 = vmatprep.subr.bf16.mxu0 0
      %1432 = vmatpush1.bf16.msra.mxu0 0
      %1433 = vmatprep.subr.bf16.mxu0 0
      %1434 = vmatpush1.bf16.msra.mxu0 0
      %1435 = vmatprep.mubr.bf16.mxu0 0
      %1436 = vmatmul.mubr.bf16.gmra.mrb[0].mxu0 %v804
      %v1437 = vpop.f32.mrb[0].mxu0
      %v1438 = vadd.f32 0.0, %v1437
      %v1439 = vpop.f32.mrb[0].mxu0
      %v1440 = vadd.f32 0.0, %v1439
      %v1441 = vpop.f32.mrb[0].mxu0
      %v1442 = vpop.f32.mrb[0].mxu0
      %1443 = vdwg.mxu0
      %v1444 = vadd.f32 %v1390, %v1438
      %v1445 = vadd.f32 %v1392, %v1440
      %v1446 = vadd.f32 %v1444, %v852
      %v1447 = vadd.f32 %v1445, %v852
      %1448 = vst [vmem:[%s146 + $0x40] sm:$0xff] %v1446
      %1449 = vst [vmem:[%s146 + $0x48] sm:$0xff] %v1447
      %v1450 = vld [vmem:[%s1248] sm:$0xff]
      %v1451 = vld [vmem:[%s1248 + $0x8] sm:$0xff]
      %v1452 = vld [vmem:[%s1248 + $0x10] sm:$0xff]
      %v1453 = vld [vmem:[%s1248 + $0x18] sm:$0xff]
      %v1454 = vld [vmem:[%s1248 + $0x20] sm:$0xff]
      %v1455 = vld [vmem:[%s1248 + $0x28] sm:$0xff]
      %v1456 = vld [vmem:[%s1396] sm:$0xff]
      %v1457 = vld [vmem:[%s1396 + $0x8] sm:$0xff]
      %v1458 = vld [vmem:[%s1396 + $0x10] sm:$0xff]
      %v1459 = vld [vmem:[%s1396 + $0x18] sm:$0xff]
      %v1460 = vld [vmem:[%s1396 + $0x20] sm:$0xff]
      %v1461 = vld [vmem:[%s1396 + $0x28] sm:$0xff]
      %1462 = vmatprep.subr.bf16.mxu0 %v1457
      %1463 = vmatpush1.bf16.msra.mxu0 %v1456
      %1464 = vmatprep.subr.bf16.mxu0 %v1459
      %1465 = vmatpush1.bf16.msra.mxu0 %v1458
      %1466 = vmatprep.subr.bf16.mxu0 %v1461
      %1467 = vmatpush1.bf16.msra.mxu0 %v1460
      %1468 = vmatprep.subr.bf16.mxu0 0
      %1469 = vmatpush1.bf16.msra.mxu0 0
      %1470 = vmatprep.subr.bf16.mxu0 0
      %1471 = vmatpush1.bf16.msra.mxu0 0
      %1472 = vmatprep.subr.bf16.mxu0 0
      %1473 = vmatpush1.bf16.msra.mxu0 0
      %1474 = vmatprep.subr.bf16.mxu0 0
      %1475 = vmatpush1.bf16.msra.mxu0 0
      %1476 = vmatprep.subr.bf16.mxu0 0
      %1477 = vmatpush1.bf16.msra.mxu0 0
      %1478 = vmatprep.subr.bf16.mxu0 0
      %1479 = vmatpush1.bf16.msra.mxu0 0
      %1480 = vmatprep.subr.bf16.mxu0 0
      %1481 = vmatpush1.bf16.msra.mxu0 0
      %1482 = vmatprep.subr.bf16.mxu0 0
      %1483 = vmatpush1.bf16.msra.mxu0 0
      %1484 = vmatprep.subr.bf16.mxu0 0
      %1485 = vmatpush1.bf16.msra.mxu0 0
      %1486 = vmatprep.subr.bf16.mxu0 0
      %1487 = vmatpush1.bf16.msra.mxu0 0
      %1488 = vmatprep.subr.bf16.mxu0 0
      %1489 = vmatpush1.bf16.msra.mxu0 0
      %1490 = vmatprep.subr.bf16.mxu0 0
      %1491 = vmatpush1.bf16.msra.mxu0 0
      %1492 = vmatprep.subr.bf16.mxu0 0
      %1493 = vmatpush1.bf16.msra.mxu0 0
      %1494 = vmatprep.mubr.bf16.mxu0 0
      %1495 = vmatmul.mubr.bf16.gmra.mrb[0].mxu0 %v709
      %v1496 = vpop.f32.mrb[0].mxu0
      %v1497 = vadd.f32 0.0, %v1496
      %v1498 = vpop.f32.mrb[0].mxu0
      %v1499 = vadd.f32 0.0, %v1498
      %v1500 = vpop.f32.mrb[0].mxu0
      %v1501 = vpop.f32.mrb[0].mxu0
      %1502 = vdwg.mxu0
      %1503 = vmatprep.subr.bf16.mxu0 %v1451
      %1504 = vmatpush1.bf16.msra.mxu0 %v1450
      %1505 = vmatprep.subr.bf16.mxu0 %v1453
      %1506 = vmatpush1.bf16.msra.mxu0 %v1452
      %1507 = vmatprep.subr.bf16.mxu0 %v1455
      %1508 = vmatpush1.bf16.msra.mxu0 %v1454
      %1509 = vmatprep.subr.bf16.mxu0 0
      %1510 = vmatpush1.bf16.msra.mxu0 0
      %1511 = vmatprep.subr.bf16.mxu0 0
      %1512 = vmatpush1.bf16.msra.mxu0 0
      %1513 = vmatprep.subr.bf16.mxu0 0
      %1514 = vmatpush1.bf16.msra.mxu0 0
      %1515 = vmatprep.subr.bf16.mxu0 0
      %1516 = vmatpush1.bf16.msra.mxu0 0
      %1517 = vmatprep.subr.bf16.mxu0 0
      %1518 = vmatpush1.bf16.msra.mxu0 0
      %1519 = vmatprep.subr.bf16.mxu0 0
      %1520 = vmatpush1.bf16.msra.mxu0 0
      %1521 = vmatprep.subr.bf16.mxu0 0
      %1522 = vmatpush1.bf16.msra.mxu0 0
      %1523 = vmatprep.subr.bf16.mxu0 0
      %1524 = vmatpush1.bf16.msra.mxu0 0
      %1525 = vmatprep.subr.bf16.mxu0 0
      %1526 = vmatpush1.bf16.msra.mxu0 0
      %1527 = vmatprep.subr.bf16.mxu0 0
      %1528 = vmatpush1.bf16.msra.mxu0 0
      %1529 = vmatprep.subr.bf16.mxu0 0
      %1530 = vmatpush1.bf16.msra.mxu0 0
      %1531 = vmatprep.subr.bf16.mxu0 0
      %1532 = vmatpush1.bf16.msra.mxu0 0
      %1533 = vmatprep.subr.bf16.mxu0 0
      %1534 = vmatpush1.bf16.msra.mxu0 0
      %1535 = vmatprep.mubr.bf16.mxu0 0
      %1536 = vmatmul.mubr.bf16.gmra.mrb[0].mxu0 %v753
      %v1537 = vpop.f32.mrb[0].mxu0
      %v1538 = vadd.f32 %v1497, %v1537
      %v1539 = vpop.f32.mrb[0].mxu0
      %v1540 = vadd.f32 %v1499, %v1539
      %v1541 = vpop.f32.mrb[0].mxu0
      %v1542 = vpop.f32.mrb[0].mxu0
      %1543 = vdwg.mxu0
      %s1544 = scalar_lea.vmem [#allocation2], 336
      %v1545 = vld [vmem:[%s1544] sm:$0xff]
      %v1546 = vld [vmem:[%s1544 + $0x8] sm:$0xff]
      %v1547 = vld [vmem:[%s1544 + $0x10] sm:$0xff]
      %v1548 = vld [vmem:[%s1544 + $0x18] sm:$0xff]
      %v1549 = vld [vmem:[%s1544 + $0x20] sm:$0xff]
      %v1550 = vld [vmem:[%s1544 + $0x28] sm:$0xff]
      %1551 = vmatprep.subr.bf16.mxu0 %v1546
      %1552 = vmatpush1.bf16.msra.mxu0 %v1545
      %1553 = vmatprep.subr.bf16.mxu0 %v1548
      %1554 = vmatpush1.bf16.msra.mxu0 %v1547
      %1555 = vmatprep.subr.bf16.mxu0 %v1550
      %1556 = vmatpush1.bf16.msra.mxu0 %v1549
      %1557 = vmatprep.subr.bf16.mxu0 0
      %1558 = vmatpush1.bf16.msra.mxu0 0
      %1559 = vmatprep.subr.bf16.mxu0 0
      %1560 = vmatpush1.bf16.msra.mxu0 0
      %1561 = vmatprep.subr.bf16.mxu0 0
      %1562 = vmatpush1.bf16.msra.mxu0 0
      %1563 = vmatprep.subr.bf16.mxu0 0
      %1564 = vmatpush1.bf16.msra.mxu0 0
      %1565 = vmatprep.subr.bf16.mxu0 0
      %1566 = vmatpush1.bf16.msra.mxu0 0
      %1567 = vmatprep.subr.bf16.mxu0 0
      %1568 = vmatpush1.bf16.msra.mxu0 0
      %1569 = vmatprep.subr.bf16.mxu0 0
      %1570 = vmatpush1.bf16.msra.mxu0 0
      %1571 = vmatprep.subr.bf16.mxu0 0
      %1572 = vmatpush1.bf16.msra.mxu0 0
      %1573 = vmatprep.subr.bf16.mxu0 0
      %1574 = vmatpush1.bf16.msra.mxu0 0
      %1575 = vmatprep.subr.bf16.mxu0 0
      %1576 = vmatpush1.bf16.msra.mxu0 0
      %1577 = vmatprep.subr.bf16.mxu0 0
      %1578 = vmatpush1.bf16.msra.mxu0 0
      %1579 = vmatprep.subr.bf16.mxu0 0
      %1580 = vmatpush1.bf16.msra.mxu0 0
      %1581 = vmatprep.subr.bf16.mxu0 0
      %1582 = vmatpush1.bf16.msra.mxu0 0
      %1583 = vmatprep.mubr.bf16.mxu0 0
      %1584 = vmatmul.mubr.bf16.gmra.mrb[0].mxu0 %v804
      %v1585 = vpop.f32.mrb[0].mxu0
      %v1586 = vadd.f32 0.0, %v1585
      %v1587 = vpop.f32.mrb[0].mxu0
      %v1588 = vadd.f32 0.0, %v1587
      %v1589 = vpop.f32.mrb[0].mxu0
      %v1590 = vpop.f32.mrb[0].mxu0
      %1591 = vdwg.mxu0
      %v1592 = vadd.f32 %v1538, %v1586
      %v1593 = vadd.f32 %v1540, %v1588
      %v1594 = vadd.f32 %v1592, %v852
      %v1595 = vadd.f32 %v1593, %v852
      %1596 = vst [vmem:[%s146 + $0x50] sm:$0xff] %v1594
      %1597 = vst [vmem:[%s146 + $0x58] sm:$0xff] %v1595
      %v1598 = vld [vmem:[%s1396] sm:$0xff]
      %v1599 = vld [vmem:[%s1396 + $0x8] sm:$0xff]
      %v1600 = vld [vmem:[%s1396 + $0x10] sm:$0xff]
      %v1601 = vld [vmem:[%s1396 + $0x18] sm:$0xff]
      %v1602 = vld [vmem:[%s1396 + $0x20] sm:$0xff]
      %v1603 = vld [vmem:[%s1396 + $0x28] sm:$0xff]
      %v1604 = vld [vmem:[%s1544] sm:$0xff]
      %v1605 = vld [vmem:[%s1544 + $0x8] sm:$0xff]
      %v1606 = vld [vmem:[%s1544 + $0x10] sm:$0xff]
      %v1607 = vld [vmem:[%s1544 + $0x18] sm:$0xff]
      %v1608 = vld [vmem:[%s1544 + $0x20] sm:$0xff]
      %v1609 = vld [vmem:[%s1544 + $0x28] sm:$0xff]
      %1610 = vmatprep.subr.bf16.mxu0 %v1605
      %1611 = vmatpush1.bf16.msra.mxu0 %v1604
      %1612 = vmatprep.subr.bf16.mxu0 %v1607
      %1613 = vmatpush1.bf16.msra.mxu0 %v1606
      %1614 = vmatprep.subr.bf16.mxu0 %v1609
      %1615 = vmatpush1.bf16.msra.mxu0 %v1608
      %1616 = vmatprep.subr.bf16.mxu0 0
      %1617 = vmatpush1.bf16.msra.mxu0 0
      %1618 = vmatprep.subr.bf16.mxu0 0
      %1619 = vmatpush1.bf16.msra.mxu0 0
      %1620 = vmatprep.subr.bf16.mxu0 0
      %1621 = vmatpush1.bf16.msra.mxu0 0
      %1622 = vmatprep.subr.bf16.mxu0 0
      %1623 = vmatpush1.bf16.msra.mxu0 0
      %1624 = vmatprep.subr.bf16.mxu0 0
      %1625 = vmatpush1.bf16.msra.mxu0 0
      %1626 = vmatprep.subr.bf16.mxu0 0
      %1627 = vmatpush1.bf16.msra.mxu0 0
      %1628 = vmatprep.subr.bf16.mxu0 0
      %1629 = vmatpush1.bf16.msra.mxu0 0
      %1630 = vmatprep.subr.bf16.mxu0 0
      %1631 = vmatpush1.bf16.msra.mxu0 0
      %1632 = vmatprep.subr.bf16.mxu0 0
      %1633 = vmatpush1.bf16.msra.mxu0 0
      %1634 = vmatprep.subr.bf16.mxu0 0
      %1635 = vmatpush1.bf16.msra.mxu0 0
      %1636 = vmatprep.subr.bf16.mxu0 0
      %1637 = vmatpush1.bf16.msra.mxu0 0
      %1638 = vmatprep.subr.bf16.mxu0 0
      %1639 = vmatpush1.bf16.msra.mxu0 0
      %1640 = vmatprep.subr.bf16.mxu0 0
      %1641 = vmatpush1.bf16.msra.mxu0 0
      %1642 = vmatprep.mubr.bf16.mxu0 0
      %1643 = vmatmul.mubr.bf16.gmra.mrb[0].mxu0 %v709
      %v1644 = vpop.f32.mrb[0].mxu0
      %v1645 = vadd.f32 0.0, %v1644
      %v1646 = vpop.f32.mrb[0].mxu0
      %v1647 = vadd.f32 0.0, %v1646
      %v1648 = vpop.f32.mrb[0].mxu0
      %v1649 = vpop.f32.mrb[0].mxu0
      %1650 = vdwg.mxu0
      %1651 = vmatprep.subr.bf16.mxu0 %v1599
      %1652 = vmatpush1.bf16.msra.mxu0 %v1598
      %1653 = vmatprep.subr.bf16.mxu0 %v1601
      %1654 = vmatpush1.bf16.msra.mxu0 %v1600
      %1655 = vmatprep.subr.bf16.mxu0 %v1603
      %1656 = vmatpush1.bf16.msra.mxu0 %v1602
      %1657 = vmatprep.subr.bf16.mxu0 0
      %1658 = vmatpush1.bf16.msra.mxu0 0
      %1659 = vmatprep.subr.bf16.mxu0 0
      %1660 = vmatpush1.bf16.msra.mxu0 0
      %1661 = vmatprep.subr.bf16.mxu0 0
      %1662 = vmatpush1.bf16.msra.mxu0 0
      %1663 = vmatprep.subr.bf16.mxu0 0
      %1664 = vmatpush1.bf16.msra.mxu0 0
      %1665 = vmatprep.subr.bf16.mxu0 0
      %1666 = vmatpush1.bf16.msra.mxu0 0
      %1667 = vmatprep.subr.bf16.mxu0 0
      %1668 = vmatpush1.bf16.msra.mxu0 0
      %1669 = vmatprep.subr.bf16.mxu0 0
      %1670 = vmatpush1.bf16.msra.mxu0 0
      %1671 = vmatprep.subr.bf16.mxu0 0
      %1672 = vmatpush1.bf16.msra.mxu0 0
      %1673 = vmatprep.subr.bf16.mxu0 0
      %1674 = vmatpush1.bf16.msra.mxu0 0
      %1675 = vmatprep.subr.bf16.mxu0 0
      %1676 = vmatpush1.bf16.msra.mxu0 0
      %1677 = vmatprep.subr.bf16.mxu0 0
      %1678 = vmatpush1.bf16.msra.mxu0 0
      %1679 = vmatprep.subr.bf16.mxu0 0
      %1680 = vmatpush1.bf16.msra.mxu0 0
      %1681 = vmatprep.subr.bf16.mxu0 0
      %1682 = vmatpush1.bf16.msra.mxu0 0
      %1683 = vmatprep.mubr.bf16.mxu0 0
      %1684 = vmatmul.mubr.bf16.gmra.mrb[0].mxu0 %v753
      %v1685 = vpop.f32.mrb[0].mxu0
      %v1686 = vadd.f32 %v1645, %v1685
      %v1687 = vpop.f32.mrb[0].mxu0
      %v1688 = vadd.f32 %v1647, %v1687
      %v1689 = vpop.f32.mrb[0].mxu0
      %v1690 = vpop.f32.mrb[0].mxu0
      %1691 = vdwg.mxu0
      %s1692 = scalar_lea.vmem [#allocation2], 384
      %v1693 = vld [vmem:[%s1692] sm:$0xff]
      %v1694 = vld [vmem:[%s1692 + $0x8] sm:$0xff]
      %v1695 = vld [vmem:[%s1692 + $0x10] sm:$0xff]
      %v1696 = vld [vmem:[%s1692 + $0x18] sm:$0xff]
      %v1697 = vld [vmem:[%s1692 + $0x20] sm:$0xff]
      %v1698 = vld [vmem:[%s1692 + $0x28] sm:$0xff]
      %1699 = vmatprep.subr.bf16.mxu0 %v1694
      %1700 = vmatpush1.bf16.msra.mxu0 %v1693
      %1701 = vmatprep.subr.bf16.mxu0 %v1696
      %1702 = vmatpush1.bf16.msra.mxu0 %v1695
      %1703 = vmatprep.subr.bf16.mxu0 %v1698
      %1704 = vmatpush1.bf16.msra.mxu0 %v1697
      %1705 = vmatprep.subr.bf16.mxu0 0
      %1706 = vmatpush1.bf16.msra.mxu0 0
      %1707 = vmatprep.subr.bf16.mxu0 0
      %1708 = vmatpush1.bf16.msra.mxu0 0
      %1709 = vmatprep.subr.bf16.mxu0 0
      %1710 = vmatpush1.bf16.msra.mxu0 0
      %1711 = vmatprep.subr.bf16.mxu0 0
      %1712 = vmatpush1.bf16.msra.mxu0 0
      %1713 = vmatprep.subr.bf16.mxu0 0
      %1714 = vmatpush1.bf16.msra.mxu0 0
      %1715 = vmatprep.subr.bf16.mxu0 0
      %1716 = vmatpush1.bf16.msra.mxu0 0
      %1717 = vmatprep.subr.bf16.mxu0 0
      %1718 = vmatpush1.bf16.msra.mxu0 0
      %1719 = vmatprep.subr.bf16.mxu0 0
      %1720 = vmatpush1.bf16.msra.mxu0 0
      %1721 = vmatprep.subr.bf16.mxu0 0
      %1722 = vmatpush1.bf16.msra.mxu0 0
      %1723 = vmatprep.subr.bf16.mxu0 0
      %1724 = vmatpush1.bf16.msra.mxu0 0
      %1725 = vmatprep.subr.bf16.mxu0 0
      %1726 = vmatpush1.bf16.msra.mxu0 0
      %1727 = vmatprep.subr.bf16.mxu0 0
      %1728 = vmatpush1.bf16.msra.mxu0 0
      %1729 = vmatprep.subr.bf16.mxu0 0
      %1730 = vmatpush1.bf16.msra.mxu0 0
      %1731 = vmatprep.mubr.bf16.mxu0 0
      %1732 = vmatmul.mubr.bf16.gmra.mrb[0].mxu0 %v804
      %v1733 = vpop.f32.mrb[0].mxu0
      %v1734 = vadd.f32 0.0, %v1733
      %v1735 = vpop.f32.mrb[0].mxu0
      %v1736 = vadd.f32 0.0, %v1735
      %v1737 = vpop.f32.mrb[0].mxu0
      %v1738 = vpop.f32.mrb[0].mxu0
      %1739 = vdwg.mxu0
      %v1740 = vadd.f32 %v1686, %v1734
      %v1741 = vadd.f32 %v1688, %v1736
      %v1742 = vadd.f32 %v1740, %v852
      %v1743 = vadd.f32 %v1741, %v852
      %1744 = vst [vmem:[%s146 + $0x60] sm:$0xff] %v1742
      %1745 = vst [vmem:[%s146 + $0x68] sm:$0xff] %v1743
      %v1746 = vld [vmem:[%s1544] sm:$0xff]
      %v1747 = vld [vmem:[%s1544 + $0x8] sm:$0xff]
      %v1748 = vld [vmem:[%s1544 + $0x10] sm:$0xff]
      %v1749 = vld [vmem:[%s1544 + $0x18] sm:$0xff]
      %v1750 = vld [vmem:[%s1544 + $0x20] sm:$0xff]
      %v1751 = vld [vmem:[%s1544 + $0x28] sm:$0xff]
      %v1752 = vld [vmem:[%s1692] sm:$0xff]
      %v1753 = vld [vmem:[%s1692 + $0x8] sm:$0xff]
      %v1754 = vld [vmem:[%s1692 + $0x10] sm:$0xff]
      %v1755 = vld [vmem:[%s1692 + $0x18] sm:$0xff]
      %v1756 = vld [vmem:[%s1692 + $0x20] sm:$0xff]
      %v1757 = vld [vmem:[%s1692 + $0x28] sm:$0xff]
      %1758 = vmatprep.subr.bf16.mxu0 %v1753
      %1759 = vmatpush1.bf16.msra.mxu0 %v1752
      %1760 = vmatprep.subr.bf16.mxu0 %v1755
      %1761 = vmatpush1.bf16.msra.mxu0 %v1754
      %1762 = vmatprep.subr.bf16.mxu0 %v1757
      %1763 = vmatpush1.bf16.msra.mxu0 %v1756
      %1764 = vmatprep.subr.bf16.mxu0 0
      %1765 = vmatpush1.bf16.msra.mxu0 0
      %1766 = vmatprep.subr.bf16.mxu0 0
      %1767 = vmatpush1.bf16.msra.mxu0 0
      %1768 = vmatprep.subr.bf16.mxu0 0
      %1769 = vmatpush1.bf16.msra.mxu0 0
      %1770 = vmatprep.subr.bf16.mxu0 0
      %1771 = vmatpush1.bf16.msra.mxu0 0
      %1772 = vmatprep.subr.bf16.mxu0 0
      %1773 = vmatpush1.bf16.msra.mxu0 0
      %1774 = vmatprep.subr.bf16.mxu0 0
      %1775 = vmatpush1.bf16.msra.mxu0 0
      %1776 = vmatprep.subr.bf16.mxu0 0
      %1777 = vmatpush1.bf16.msra.mxu0 0
      %1778 = vmatprep.subr.bf16.mxu0 0
      %1779 = vmatpush1.bf16.msra.mxu0 0
      %1780 = vmatprep.subr.bf16.mxu0 0
      %1781 = vmatpush1.bf16.msra.mxu0 0
      %1782 = vmatprep.subr.bf16.mxu0 0
      %1783 = vmatpush1.bf16.msra.mxu0 0
      %1784 = vmatprep.subr.bf16.mxu0 0
      %1785 = vmatpush1.bf16.msra.mxu0 0
      %1786 = vmatprep.subr.bf16.mxu0 0
      %1787 = vmatpush1.bf16.msra.mxu0 0
      %1788 = vmatprep.subr.bf16.mxu0 0
      %1789 = vmatpush1.bf16.msra.mxu0 0
      %1790 = vmatprep.mubr.bf16.mxu0 0
      %1791 = vmatmul.mubr.bf16.gmra.mrb[0].mxu0 %v709
      %v1792 = vpop.f32.mrb[0].mxu0
      %v1793 = vadd.f32 0.0, %v1792
      %v1794 = vpop.f32.mrb[0].mxu0
      %v1795 = vadd.f32 0.0, %v1794
      %v1796 = vpop.f32.mrb[0].mxu0
      %v1797 = vpop.f32.mrb[0].mxu0
      %1798 = vdwg.mxu0
      %1799 = vmatprep.subr.bf16.mxu0 %v1747
      %1800 = vmatpush1.bf16.msra.mxu0 %v1746
      %1801 = vmatprep.subr.bf16.mxu0 %v1749
      %1802 = vmatpush1.bf16.msra.mxu0 %v1748
      %1803 = vmatprep.subr.bf16.mxu0 %v1751
      %1804 = vmatpush1.bf16.msra.mxu0 %v1750
      %1805 = vmatprep.subr.bf16.mxu0 0
      %1806 = vmatpush1.bf16.msra.mxu0 0
      %1807 = vmatprep.subr.bf16.mxu0 0
      %1808 = vmatpush1.bf16.msra.mxu0 0
      %1809 = vmatprep.subr.bf16.mxu0 0
      %1810 = vmatpush1.bf16.msra.mxu0 0
      %1811 = vmatprep.subr.bf16.mxu0 0
      %1812 = vmatpush1.bf16.msra.mxu0 0
      %1813 = vmatprep.subr.bf16.mxu0 0
      %1814 = vmatpush1.bf16.msra.mxu0 0
      %1815 = vmatprep.subr.bf16.mxu0 0
      %1816 = vmatpush1.bf16.msra.mxu0 0
      %1817 = vmatprep.subr.bf16.mxu0 0
      %1818 = vmatpush1.bf16.msra.mxu0 0
      %1819 = vmatprep.subr.bf16.mxu0 0
      %1820 = vmatpush1.bf16.msra.mxu0 0
      %1821 = vmatprep.subr.bf16.mxu0 0
      %1822 = vmatpush1.bf16.msra.mxu0 0
      %1823 = vmatprep.subr.bf16.mxu0 0
      %1824 = vmatpush1.bf16.msra.mxu0 0
      %1825 = vmatprep.subr.bf16.mxu0 0
      %1826 = vmatpush1.bf16.msra.mxu0 0
      %1827 = vmatprep.subr.bf16.mxu0 0
      %1828 = vmatpush1.bf16.msra.mxu0 0
      %1829 = vmatprep.subr.bf16.mxu0 0
      %1830 = vmatpush1.bf16.msra.mxu0 0
      %1831 = vmatprep.mubr.bf16.mxu0 0
      %1832 = vmatmul.mubr.bf16.gmra.mrb[0].mxu0 %v753
      %v1833 = vpop.f32.mrb[0].mxu0
      %v1834 = vadd.f32 %v1793, %v1833
      %v1835 = vpop.f32.mrb[0].mxu0
      %v1836 = vadd.f32 %v1795, %v1835
      %v1837 = vpop.f32.mrb[0].mxu0
      %v1838 = vpop.f32.mrb[0].mxu0
      %1839 = vdwg.mxu0
      %s1840 = scalar_lea.vmem [#allocation2], 432
      %v1841 = vld [vmem:[%s1840] sm:$0xff]
      %v1842 = vld [vmem:[%s1840 + $0x8] sm:$0xff]
      %v1843 = vld [vmem:[%s1840 + $0x10] sm:$0xff]
      %v1844 = vld [vmem:[%s1840 + $0x18] sm:$0xff]
      %v1845 = vld [vmem:[%s1840 + $0x20] sm:$0xff]
      %v1846 = vld [vmem:[%s1840 + $0x28] sm:$0xff]
      %1847 = vmatprep.subr.bf16.mxu0 %v1842
      %1848 = vmatpush1.bf16.msra.mxu0 %v1841
      %1849 = vmatprep.subr.bf16.mxu0 %v1844
      %1850 = vmatpush1.bf16.msra.mxu0 %v1843
      %1851 = vmatprep.subr.bf16.mxu0 %v1846
      %1852 = vmatpush1.bf16.msra.mxu0 %v1845
      %1853 = vmatprep.subr.bf16.mxu0 0
      %1854 = vmatpush1.bf16.msra.mxu0 0
      %1855 = vmatprep.subr.bf16.mxu0 0
      %1856 = vmatpush1.bf16.msra.mxu0 0
      %1857 = vmatprep.subr.bf16.mxu0 0
      %1858 = vmatpush1.bf16.msra.mxu0 0
      %1859 = vmatprep.subr.bf16.mxu0 0
      %1860 = vmatpush1.bf16.msra.mxu0 0
      %1861 = vmatprep.subr.bf16.mxu0 0
      %1862 = vmatpush1.bf16.msra.mxu0 0
      %1863 = vmatprep.subr.bf16.mxu0 0
      %1864 = vmatpush1.bf16.msra.mxu0 0
      %1865 = vmatprep.subr.bf16.mxu0 0
      %1866 = vmatpush1.bf16.msra.mxu0 0
      %1867 = vmatprep.subr.bf16.mxu0 0
      %1868 = vmatpush1.bf16.msra.mxu0 0
      %1869 = vmatprep.subr.bf16.mxu0 0
      %1870 = vmatpush1.bf16.msra.mxu0 0
      %1871 = vmatprep.subr.bf16.mxu0 0
      %1872 = vmatpush1.bf16.msra.mxu0 0
      %1873 = vmatprep.subr.bf16.mxu0 0
      %1874 = vmatpush1.bf16.msra.mxu0 0
      %1875 = vmatprep.subr.bf16.mxu0 0
      %1876 = vmatpush1.bf16.msra.mxu0 0
      %1877 = vmatprep.subr.bf16.mxu0 0
      %1878 = vmatpush1.bf16.msra.mxu0 0
      %1879 = vmatprep.mubr.bf16.mxu0 0
      %1880 = vmatmul.mubr.bf16.gmra.mrb[0].mxu0 %v804
      %v1881 = vpop.f32.mrb[0].mxu0
      %v1882 = vadd.f32 0.0, %v1881
      %v1883 = vpop.f32.mrb[0].mxu0
      %v1884 = vadd.f32 0.0, %v1883
      %v1885 = vpop.f32.mrb[0].mxu0
      %v1886 = vpop.f32.mrb[0].mxu0
      %1887 = vdwg.mxu0
      %v1888 = vadd.f32 %v1834, %v1882
      %v1889 = vadd.f32 %v1836, %v1884
      %v1890 = vadd.f32 %v1888, %v852
      %v1891 = vadd.f32 %v1889, %v852
      %1892 = vst [vmem:[%s146 + $0x70] sm:$0xff] %v1890
      %1893 = vst [vmem:[%s146 + $0x78] sm:$0xff] %v1891
      %s1894 = smul.u32 16, %s19
      %p1895 = scmp.lt.s32.totalorder %s18, 1
      %s1896 = scalar_select %p1895, %s18, 1
      %p1897 = scmp.lt.s32.totalorder %s1894, 31
      %s1898 = scalar_select %p1897, %s1894, 31
      %s1899 = smul.addr %s1896, 32
      %s1900 = sadd.s32 %s1898, %s1899
      %s1901 = smul.addr %s1900, 8
      %s1902 = scalar_lea.vmem %s3, %s1901
      // Predicated region
      $region66: #{conv3d_3x3x3_pallas.1} parent=27 // pred_check
        %p1903 = pneg %p88
      $region67: #{conv3d_3x3x3_pallas.1} parent=27 // pred_check_branch
        %1905 = sbr.rel (%p1903) target = $region69
      $region68: #{conv3d_3x3x3_pallas.1} parent=27 // pred_region
        %s1906 = smul.u32 16, %s19
      $region69: #{conv3d_3x3x3_pallas.1} parent=27 // pred_fallthru
        _
    $region28: #{conv3d_3x3x3_pallas.1} parent=5 // pred_fallthru
      _
    %p1907 = scmp.le.s32.totalorder 2, %s9
    // Predicated region
    $region70: #{conv3d_3x3x3_pallas.1} parent=5 // pred_check
      %p1908 = pneg %p1907
    $region71: #{conv3d_3x3x3_pallas.1} parent=5 // pred_check_branch
      %1910 = sbr.rel (%p1908) target = $region73
    $region72: #{conv3d_3x3x3_pallas.1} parent=5 // pred_region
      %s1911 = ssub.s32 %s9, 2
      // Predicated region
      $region74: #{conv3d_3x3x3_pallas.1} parent=72 // pred_check
        %p1912 = pneg %p94
      $region75: #{conv3d_3x3x3_pallas.1} parent=72 // pred_check_branch
        %1914 = sbr.rel (%p1912) target = $region77
      $region76: #{conv3d_3x3x3_pallas.1} parent=72 // pred_region
        %s1915 = smul.u32 16, %s21
        %p1916 = scmp.lt.s32.totalorder %s20, 1
        %s1917 = scalar_select %p1916, %s20, 1
        %p1918 = scmp.lt.s32.totalorder %s1915, 31
        %s1919 = scalar_select %p1918, %s1915, 31
        %s1920 = smul.addr %s1917, 32
        %s1921 = sadd.s32 %s1919, %s1920
        %s1922 = smul.addr %s1921, 8
        %s1923 = scalar_lea.vmem %s3, %s1922
      $region77: #{conv3d_3x3x3_pallas.1} parent=72 // pred_fallthru
        _
    $region73: #{conv3d_3x3x3_pallas.1} parent=5 // pred_fallthru
      _
  $region6: #{conv3d_3x3x3_pallas.1} parent=0 // loop_footer
    %s13 = sadd.s32 1, %s9
  $region7: #{conv3d_3x3x3_pallas.1} parent=0 // loop_footer_branch
    %8 = sbr.rel target = $region3
  $region8: #{conv3d_3x3x3_pallas.1} parent=0 // loop_exit
    _
  %1924 = vsyncmov [#allocation3]
  %s1925 = vpop.sfrf %1924
  %p1926 = scmp.eq.s32.totalorder %s1925, 0
  %p1927 = pneg %p1926
  %1929 = shalt.err (%p1927)

</llo_original>
